<compile_context>
chip_gen: v6e
topology: v6e:2x2x1
jax: 0.10.0
libtpu: 0.0.40
codegen_flags: <defaults>
</compile_context>

<pallas_src>
import math
from functools import partial

import jax
import jax.numpy as jnp
import numpy as np
from jax.experimental import pallas as pl
from jax.experimental.pallas import tpu as pltpu

FILTER_SIZES = (2, 3, 4)


def _round_up(v, m):
    return -(-v // m) * m


def _wordcnn_kernel(x_ref, w_ref, b_ref, m_ref, o_ref, xs_ref, *,
                    d, w_win, cp, groups, l_out, tail_start, max_fs,
                    row_block, lanes):
    """Fused im2col conv (all filters/taps) -> masked max-over-time -> bias -> ReLU.

    x_ref  : (tile_n, lanes)     lane-dense embeddings, lanes = l_pad * d
    w_ref  : (w_win, cp)         fused weight slab, w_win = max_fs * d (one MXU tile)
    b_ref  : (1, cp)             zero-padded biases (f32)
    m_ref  : (mask_rows, cp)     additive 0/-inf mask for the tail time steps
    o_ref  : (tile_n, cp)        pooled output (f32, lane-dense)
    xs_ref : (row_block, lanes)  VMEM scratch holding the phase-rolled rows
    """
    tile_n = x_ref.shape[0]
    w_slab = w_ref[...]                 # single weight tile reused by every matmul
    bias = b_ref[...]

    for rb in range(tile_n // row_block):
        rows = pl.ds(rb * row_block, row_block)
        pooled = jnp.full((row_block, cp), -jnp.inf, jnp.float32)

        for p in range(max_fs):          # phase p covers t = g * max_fs + p
            if p >= l_out:
                break
            if p > 0:
                # Shift this row block left by p*d lanes (XLU lane rotate) so every
                # im2col window below is a 128-aligned lane slice of the scratch.
                xs_ref[...] = pltpu.roll(x_ref[rows, :], shift=lanes - p * d, axis=1)
            for g in range(groups):
                t = g * max_fs + p
                if t >= l_out:
                    continue             # beyond the last conv output time
                if p == 0:
                    win = x_ref[rows, pl.ds(g * w_win, w_win)]
                else:
                    win = xs_ref[:, pl.ds(g * w_win, w_win)]
                conv = jnp.dot(win, w_slab, preferred_element_type=jnp.float32)
                if t >= tail_start:
                    # Only the last (max_fs - min_fs) time steps need masking.
                    conv = conv + m_ref[pl.ds(t - tail_start, 1), :]
                pooled = jnp.maximum(pooled, conv)

        # Bias + ReLU hoisted past the max-pool (exact: bias const over t, ReLU monotone).
        o_ref[rows, :] = jnp.maximum(pooled + bias, 0.0).astype(o_ref.dtype)


def prepare_wordcnn_params(weights, biases, sent_len, *, filter_sizes=FILTER_SIZES,
                           compute_dtype=jnp.bfloat16):
    """Build the fused weight slab / bias / tail mask ONCE (model init), not per call."""
    filter_sizes = tuple(int(f) for f in filter_sizes)
    max_fs, min_fs = max(filter_sizes), min(filter_sizes)
    assert sent_len >= max_fs, "sent_len must be >= max filter size"
    _, d, c = np.asarray(weights[0]).shape
    n_out = len(filter_sizes) * c
    cp = max(128, _round_up(n_out, 128))        # lane-dense output width
    w_win = max_fs * d                          # im2col window width / MXU K
    assert w_win % 128 == 0, "max(filter_sizes) * word_dim must be a multiple of 128"

    l_pad = _round_up(sent_len, max_fs)         # time padded to whole groups (zeros)
    groups = l_pad // max_fs
    l_out = sent_len - min_fs + 1               # conv output times pooled over
    tail_start = sent_len - max_fs + 1          # first t needing a mask row
    mask_rows = max(1, l_out - tail_start)      # == max_fs - min_fs (>=1 dummy row)

    w_np = np.zeros((w_win, cp), np.float32)
    b_np = np.zeros((1, cp), np.float32)
    for i, (fs, w, b) in enumerate(zip(filter_sizes, weights, biases)):
        w = np.asarray(w, np.float32)
        assert w.shape == (fs, d, c)
        for k in range(fs):
            w_np[k * d:(k + 1) * d, i * c:(i + 1) * c] = w[k]
        b_np[0, i * c:(i + 1) * c] = np.asarray(b, np.float32).reshape(c)

    m_np = np.zeros((mask_rows, cp), np.float32)
    for r in range(mask_rows):
        t = tail_start + r
        for i, fs in enumerate(filter_sizes):
            if t > sent_len - fs:
                m_np[r, i * c:(i + 1) * c] = -np.inf

    return dict(
        w_slab=jnp.asarray(w_np, compute_dtype),
        b_pad=jnp.asarray(b_np, jnp.float32),
        mask=jnp.asarray(m_np, jnp.float32),
        sent_len=int(sent_len), l_pad=l_pad, groups=groups, l_out=l_out,
        tail_start=tail_start, mask_rows=mask_rows,
        d=int(d), c=int(c), n_out=n_out, cp=cp, w_win=w_win,
        max_fs=max_fs, min_fs=min_fs, filter_sizes=filter_sizes,
        compute_dtype=compute_dtype,
    )


def _choose_tiles(n, itemsize, tile_n=None, row_block=None):
    if tile_n is None:
        tile_n = 512                    # review: 128-512 sentences per grid step
    tile_n = max(8, min(tile_n, _round_up(n, 8)))
    # v7x has 2 TensorCores: keep >= 2 "parallel" grid steps whenever N allows.
    if n >= 16 and pl.cdiv(n, tile_n) < 2:
        tile_n = _round_up(pl.cdiv(n, 2), 8)
    if row_block is None:
        # Inner row block keeps pooled/conv/roll values inside the 64-vreg file.
        row_block = 64 if itemsize <= 2 else 32
    row_block = _round_up(min(row_block, tile_n), 8)
    tile_n = _round_up(tile_n, row_block)
    return tile_n, row_block


def wordcnn_encode(batch_embed, params, *, tile_n=None, row_block=None, trim=True):
    """batch_embed: (N, L, D) float; params from prepare_wordcnn_params.

    Returns (N, 3*C) pooled reps.  With trim=False the lane-padded (N, cp) slab
    is returned instead (extra columns are exactly zero), so a downstream matmul
    can consume it without a slice copy.
    """
    n, l, d = batch_embed.shape
    assert l == params["sent_len"] and d == params["d"]
    cd = params["compute_dtype"]
    itemsize = np.dtype(cd).itemsize
    l_pad, cp, w_win = params["l_pad"], params["cp"], params["w_win"]
    lanes = l_pad * d

    # Lane-dense LHS: (N, l_pad*D).  In the full model this cast/reshape should be
    # fused into the embedding-sum producer so x never materializes as (N, L, 32).
    x = batch_embed.astype(cd)
    if l_pad != l:
        x = jnp.pad(x, ((0, 0), (0, l_pad - l), (0, 0)))
    x = x.reshape(n, lanes)

    tile_n, row_block = _choose_tiles(n, itemsize, tile_n, row_block)
    grid = (pl.cdiv(n, tile_n),)

    kernel = partial(
        _wordcnn_kernel,
        d=d, w_win=w_win, cp=cp, groups=params["groups"], l_out=params["l_out"],
        tail_start=params["tail_start"], max_fs=params["max_fs"],
        row_block=row_block, lanes=lanes)

    working = (2 * tile_n * lanes * itemsize       # x, double-buffered
               + 2 * tile_n * cp * 4               # out, double-buffered
               + row_block * lanes * itemsize      # roll scratch
               + w_win * cp * itemsize + cp * 4 + params["mask_rows"] * cp * 4)
    vmem_limit = int(min(2 * working + (4 << 20), 96 << 20))

    cost = pl.CostEstimate(
        flops=int(2 * n * params["l_out"] * w_win * cp),
        transcendentals=0,
        bytes_accessed=int(x.size * itemsize + n * cp * 4 + w_win * cp * itemsize))

    out = pl.pallas_call(
        kernel,
        out_shape=jax.ShapeDtypeStruct((n, cp), jnp.float32),
        grid=grid,
        in_specs=[
            pl.BlockSpec((tile_n, lanes), lambda i: (i, 0)),
            pl.BlockSpec((w_win, cp), lambda i: (0, 0)),
            pl.BlockSpec((1, cp), lambda i: (0, 0)),
            pl.BlockSpec((params["mask_rows"], cp), lambda i: (0, 0)),
        ],
        out_specs=pl.BlockSpec((tile_n, cp), lambda i: (i, 0)),
        scratch_shapes=[pltpu.VMEM((row_block, lanes), cd)],
        compiler_params=pltpu.CompilerParams(
            dimension_semantics=("parallel",),
            vmem_limit_bytes=vmem_limit),
        cost_estimate=cost,
    )(x, params["w_slab"], params["b_pad"], params["mask"])

    return out[:, :params["n_out"]] if trim else out


def wordcnn_forward(word_ids, extword_ids, word_table, ext_table, params, **kw):
    """Eval-mode WordCNNEncoder.forward.  Embedding gathers stay in XLA glue."""
    # TODO(synk): training-mode dropout (p=0.15) not implemented -- eval forward only.
    batch_embed = (jnp.take(word_table, word_ids, axis=0)
                   + jnp.take(ext_table, extword_ids, axis=0))
    return wordcnn_encode(batch_embed, params, **kw)


def reference_forward(batch_embed, weights, biases, filter_sizes=FILTER_SIZES):
    """Pure-JAX f32 reference of the PyTorch forward (eval mode)."""
    n, l, _ = batch_embed.shape
    outs = []
    for fs, w, b in zip(filter_sizes, weights, biases):
        l_out = l - fs + 1
        acc = jnp.zeros((n, l_out, w.shape[2]), jnp.float32)
        for k in range(fs):
            acc = acc + jnp.einsum("nld,dc->nlc", batch_embed[:, k:k + l_out, :], w[k],
                                   precision=jax.lax.Precision.HIGHEST)
        h = jax.nn.relu(acc + jnp.asarray(b).reshape(1, 1, -1))
        outs.append(jnp.max(h, axis=1))
    return jnp.concatenate(outs, axis=1)


if __name__ == "__main__":
    # Small, module-consistent shapes.
    VOCAB_SIZE = 50        # vocab.word_size
    EXT_VOCAB_SIZE = 60    # extword embedding rows
    D = 32                 # emb_vocab.word_dim == out_channel
    C = D                  # out_channel
    N, L = 16, 16          # sen_num, sent_len

    key = jax.random.PRNGKey(0)
    (k_wtab, k_etab, k_wid, k_eid, k_w, k_b, k_wid2, k_eid2) = jax.random.split(key, 8)

    # Deterministic synthetic parameters (mirrors nn.Embedding / nn.Conv2d shapes).
    word_table = jax.random.normal(k_wtab, (VOCAB_SIZE, D), jnp.float32).at[0].set(0.0)
    ext_table = 0.1 * jax.random.normal(k_etab, (EXT_VOCAB_SIZE, D), jnp.float32)

    w_keys = jax.random.split(k_w, len(FILTER_SIZES))
    b_keys = jax.random.split(k_b, len(FILTER_SIZES))
    weights, biases = [], []
    for i, fs in enumerate(FILTER_SIZES):
        bound = 1.0 / math.sqrt(fs * D)
        w_torch = jax.random.uniform(w_keys[i], (C, 1, fs, D), jnp.float32, -bound, bound)
        weights.append(jnp.transpose(w_torch[:, 0], (1, 2, 0)))   # (fs, D, C)
        biases.append(jax.random.uniform(b_keys[i], (C,), jnp.float32, -bound, bound))

    # ---- case 1: N=16, L=16 ------------------------------------------------
    word_ids = jax.random.randint(k_wid, (N, L), 0, VOCAB_SIZE)
    extword_ids = jax.random.randint(k_eid, (N, L), 0, EXT_VOCAB_SIZE)
    batch_embed = (jnp.take(word_table, word_ids, axis=0)
                   + jnp.take(ext_table, extword_ids, axis=0))
    ref = reference_forward(batch_embed, weights, biases)

    # f32 path: module-exact numerics.
    params_f32 = prepare_wordcnn_params(weights, biases, L, compute_dtype=jnp.float32)
    reps = jax.block_until_ready(
        wordcnn_forward(word_ids, extword_ids, word_table, ext_table, params_f32))
    assert reps.shape == (N, len(FILTER_SIZES) * C)
    assert bool(jnp.allclose(reps, ref, atol=1e-3, rtol=1e-3)), \
        f"f32 max diff {float(jnp.max(jnp.abs(reps - ref)))}"

    # Default bf16 DMA path (f32 accumulate + f32 epilogue): halves x/weight bytes.
    params_bf16 = prepare_wordcnn_params(weights, biases, L)
    reps_bf16 = jax.block_until_ready(
        wordcnn_forward(word_ids, extword_ids, word_table, ext_table, params_bf16))
    assert bool(jnp.allclose(reps_bf16, ref, atol=3e-2, rtol=3e-2)), \
        f"bf16 max diff {float(jnp.max(jnp.abs(reps_bf16 - ref)))}"

    # ---- case 2: ragged shapes (N not multiple of tile_n, L not of max_fs) ---
    N2, L2 = 20, 15
    wid2 = jax.random.randint(k_wid2, (N2, L2), 0, VOCAB_SIZE)
    eid2 = jax.random.randint(k_eid2, (N2, L2), 0, EXT_VOCAB_SIZE)
    be2 = (jnp.take(word_table, wid2, axis=0) + jnp.take(ext_table, eid2, axis=0))
    ref2 = reference_forward(be2, weights, biases)
    params2 = prepare_wordcnn_params(weights, biases, L2, compute_dtype=jnp.float32)
    reps2 = jax.block_until_ready(wordcnn_encode(be2, params2))
    assert reps2.shape == (N2, len(FILTER_SIZES) * C)
    assert bool(jnp.allclose(reps2, ref2, atol=1e-3, rtol=1e-3)), \
        f"ragged max diff {float(jnp.max(jnp.abs(reps2 - ref2)))}"

    print("KERNEL_OK")
</pallas_src>

<mosaic_0001>
module attributes {stable_mosaic.version = 11 : i64} {
  func.func @_wordcnn_kernel(%arg0: i32, %arg1: memref<8x512xf32, #tpu.memory_space<vmem>>, %arg2: memref<128x128xf32, #tpu.memory_space<vmem>>, %arg3: memref<1x128xf32, #tpu.memory_space<vmem>>, %arg4: memref<2x128xf32, #tpu.memory_space<vmem>>, %arg5: memref<8x128xf32, #tpu.memory_space<vmem>>, %arg6: memref<8x512xf32, #tpu.memory_space<vmem>>) attributes {dimension_semantics = [#tpu.dimension_semantics<parallel>], iteration_bounds = array<i64: 2>, scalar_prefetch = 0 : i64, scratch_operands = 1 : i64, tpu.core_type = #tpu.core_type<tc>, window_params = [{transform_indices = @transform_0, window_bounds = array<i64: 8, 512>}, {pipeline_mode = #tpu.pipeline_mode<synchronous>, transform_indices = @transform_1, window_bounds = array<i64: 128, 128>}, {pipeline_mode = #tpu.pipeline_mode<synchronous>, transform_indices = @transform_2, window_bounds = array<i64: 1, 128>}, {pipeline_mode = #tpu.pipeline_mode<synchronous>, transform_indices = @transform_3, window_bounds = array<i64: 2, 128>}, {transform_indices = @transform_4, window_bounds = array<i64: 8, 128>}]} {
    %c0 = arith.constant 0 : index
    %c0_0 = arith.constant 0 : index
    %0 = vector.load %arg2[%c0, %c0_0] : memref<128x128xf32, #tpu.memory_space<vmem>>, vector<128x128xf32>
    %c0_1 = arith.constant 0 : index
    %c0_2 = arith.constant 0 : index
    %1 = vector.load %arg3[%c0_1, %c0_2] : memref<1x128xf32, #tpu.memory_space<vmem>>, vector<1x128xf32>
    %cst = arith.constant 0xFF800000 : f32
    %2 = vector.broadcast %cst : f32 to vector<8x128xf32>
    %c0_3 = arith.constant 0 : index
    %c0_4 = arith.constant 0 : index
    %3 = vector.load %arg1[%c0_3, %c0_4] : memref<8x512xf32, #tpu.memory_space<vmem>>, vector<8x128xf32>
    %cst_5 = arith.constant dense<0.000000e+00> : vector<8x128xf32>
    %4 = tpu.matmul %3, %0, %cst_5 {dimension_numbers = #tpu.dot_dimension_numbers<[1], [0], [0], [1], [0, 0, 1, 1], [], []>} : vector<8x128xf32>, vector<128x128xf32>, vector<8x128xf32> -> vector<8x128xf32>
    %5 = arith.maximumf %2, %4 : vector<8x128xf32>
    %c0_6 = arith.constant 0 : index
    %c128 = arith.constant 128 : index
    %6 = vector.load %arg1[%c0_6, %c128] : memref<8x512xf32, #tpu.memory_space<vmem>>, vector<8x128xf32>
    %cst_7 = arith.constant dense<0.000000e+00> : vector<8x128xf32>
    %7 = tpu.matmul %6, %0, %cst_7 {dimension_numbers = #tpu.dot_dimension_numbers<[1], [0], [0], [1], [0, 0, 1, 1], [], []>} : vector<8x128xf32>, vector<128x128xf32>, vector<8x128xf32> -> vector<8x128xf32>
    %8 = arith.maximumf %5, %7 : vector<8x128xf32>
    %c0_8 = arith.constant 0 : index
    %c256 = arith.constant 256 : index
    %9 = vector.load %arg1[%c0_8, %c256] : memref<8x512xf32, #tpu.memory_space<vmem>>, vector<8x128xf32>
    %cst_9 = arith.constant dense<0.000000e+00> : vector<8x128xf32>
    %10 = tpu.matmul %9, %0, %cst_9 {dimension_numbers = #tpu.dot_dimension_numbers<[1], [0], [0], [1], [0, 0, 1, 1], [], []>} : vector<8x128xf32>, vector<128x128xf32>, vector<8x128xf32> -> vector<8x128xf32>
    %11 = arith.maximumf %8, %10 : vector<8x128xf32>
    %c0_10 = arith.constant 0 : index
    %c384 = arith.constant 384 : index
    %12 = vector.load %arg1[%c0_10, %c384] : memref<8x512xf32, #tpu.memory_space<vmem>>, vector<8x128xf32>
    %cst_11 = arith.constant dense<0.000000e+00> : vector<8x128xf32>
    %13 = tpu.matmul %12, %0, %cst_11 {dimension_numbers = #tpu.dot_dimension_numbers<[1], [0], [0], [1], [0, 0, 1, 1], [], []>} : vector<8x128xf32>, vector<128x128xf32>, vector<8x128xf32> -> vector<8x128xf32>
    %14 = arith.maximumf %11, %13 : vector<8x128xf32>
    %c0_12 = arith.constant 0 : index
    %c0_13 = arith.constant 0 : index
    %15 = vector.load %arg1[%c0_12, %c0_13] : memref<8x512xf32, #tpu.memory_space<vmem>>, vector<8x512xf32>
    %c480_i32 = arith.constant 480 : i32
    %16 = tpu.dynamic_rotate %15 by %c480_i32 dim 1 : vector<8x512xf32>, i32 -> vector<8x512xf32>
    %c0_14 = arith.constant 0 : index
    %c0_15 = arith.constant 0 : index
    %17 = vector.load %arg6[%c0_14, %c0_15] : memref<8x512xf32, #tpu.memory_space<vmem>>, vector<8x512xf32>
    tpu.vector_store %arg6[%c0_14, %c0_15], %16 {strides = array<i32>} : memref<8x512xf32, #tpu.memory_space<vmem>>, vector<8x512xf32>,
    %c0_16 = arith.constant 0 : index
    %c0_17 = arith.constant 0 : index
    %18 = vector.load %arg6[%c0_16, %c0_17] : memref<8x512xf32, #tpu.memory_space<vmem>>, vector<8x128xf32>
    %cst_18 = arith.constant dense<0.000000e+00> : vector<8x128xf32>
    %19 = tpu.matmul %18, %0, %cst_18 {dimension_numbers = #tpu.dot_dimension_numbers<[1], [0], [0], [1], [0, 0, 1, 1], [], []>} : vector<8x128xf32>, vector<128x128xf32>, vector<8x128xf32> -> vector<8x128xf32>
    %20 = arith.maximumf %14, %19 : vector<8x128xf32>
    %c0_19 = arith.constant 0 : index
    %c128_20 = arith.constant 128 : index
    %21 = vector.load %arg6[%c0_19, %c128_20] : memref<8x512xf32, #tpu.memory_space<vmem>>, vector<8x128xf32>
    %cst_21 = arith.constant dense<0.000000e+00> : vector<8x128xf32>
    %22 = tpu.matmul %21, %0, %cst_21 {dimension_numbers = #tpu.dot_dimension_numbers<[1], [0], [0], [1], [0, 0, 1, 1], [], []>} : vector<8x128xf32>, vector<128x128xf32>, vector<8x128xf32> -> vector<8x128xf32>
    %23 = arith.maximumf %20, %22 : vector<8x128xf32>
    %c0_22 = arith.constant 0 : index
    %c256_23 = arith.constant 256 : index
    %24 = vector.load %arg6[%c0_22, %c256_23] : memref<8x512xf32, #tpu.memory_space<vmem>>, vector<8x128xf32>
    %cst_24 = arith.constant dense<0.000000e+00> : vector<8x128xf32>
    %25 = tpu.matmul %24, %0, %cst_24 {dimension_numbers = #tpu.dot_dimension_numbers<[1], [0], [0], [1], [0, 0, 1, 1], [], []>} : vector<8x128xf32>, vector<128x128xf32>, vector<8x128xf32> -> vector<8x128xf32>
    %26 = arith.maximumf %23, %25 : vector<8x128xf32>
    %c0_25 = arith.constant 0 : index
    %c384_26 = arith.constant 384 : index
    %27 = vector.load %arg6[%c0_25, %c384_26] : memref<8x512xf32, #tpu.memory_space<vmem>>, vector<8x128xf32>
    %cst_27 = arith.constant dense<0.000000e+00> : vector<8x128xf32>
    %28 = tpu.matmul %27, %0, %cst_27 {dimension_numbers = #tpu.dot_dimension_numbers<[1], [0], [0], [1], [0, 0, 1, 1], [], []>} : vector<8x128xf32>, vector<128x128xf32>, vector<8x128xf32> -> vector<8x128xf32>
    %c0_28 = arith.constant 0 : index
    %c0_29 = arith.constant 0 : index
    %29 = vector.load %arg4[%c0_28, %c0_29] : memref<2x128xf32, #tpu.memory_space<vmem>>, vector<1x128xf32>
    %30 = vector.broadcast %29 : vector<1x128xf32> to vector<8x128xf32>
    %31 = arith.addf %28, %30 : vector<8x128xf32>
    %32 = arith.maximumf %26, %31 : vector<8x128xf32>
    %c0_30 = arith.constant 0 : index
    %c0_31 = arith.constant 0 : index
    %33 = vector.load %arg1[%c0_30, %c0_31] : memref<8x512xf32, #tpu.memory_space<vmem>>, vector<8x512xf32>
    %c448_i32 = arith.constant 448 : i32
    %34 = tpu.dynamic_rotate %33 by %c448_i32 dim 1 : vector<8x512xf32>, i32 -> vector<8x512xf32>
    %c0_32 = arith.constant 0 : index
    %c0_33 = arith.constant 0 : index
    %35 = vector.load %arg6[%c0_32, %c0_33] : memref<8x512xf32, #tpu.memory_space<vmem>>, vector<8x512xf32>
    tpu.vector_store %arg6[%c0_32, %c0_33], %34 {strides = array<i32>} : memref<8x512xf32, #tpu.memory_space<vmem>>, vector<8x512xf32>,
    %c0_34 = arith.constant 0 : index
    %c0_35 = arith.constant 0 : index
    %36 = vector.load %arg6[%c0_34, %c0_35] : memref<8x512xf32, #tpu.memory_space<vmem>>, vector<8x128xf32>
    %cst_36 = arith.constant dense<0.000000e+00> : vector<8x128xf32>
    %37 = tpu.matmul %36, %0, %cst_36 {dimension_numbers = #tpu.dot_dimension_numbers<[1], [0], [0], [1], [0, 0, 1, 1], [], []>} : vector<8x128xf32>, vector<128x128xf32>, vector<8x128xf32> -> vector<8x128xf32>
    %38 = arith.maximumf %32, %37 : vector<8x128xf32>
    %c0_37 = arith.constant 0 : index
    %c128_38 = arith.constant 128 : index
    %39 = vector.load %arg6[%c0_37, %c128_38] : memref<8x512xf32, #tpu.memory_space<vmem>>, vector<8x128xf32>
    %cst_39 = arith.constant dense<0.000000e+00> : vector<8x128xf32>
    %40 = tpu.matmul %39, %0, %cst_39 {dimension_numbers = #tpu.dot_dimension_numbers<[1], [0], [0], [1], [0, 0, 1, 1], [], []>} : vector<8x128xf32>, vector<128x128xf32>, vector<8x128xf32> -> vector<8x128xf32>
    %41 = arith.maximumf %38, %40 : vector<8x128xf32>
    %c0_40 = arith.constant 0 : index
    %c256_41 = arith.constant 256 : index
    %42 = vector.load %arg6[%c0_40, %c256_41] : memref<8x512xf32, #tpu.memory_space<vmem>>, vector<8x128xf32>
    %cst_42 = arith.constant dense<0.000000e+00> : vector<8x128xf32>
    %43 = tpu.matmul %42, %0, %cst_42 {dimension_numbers = #tpu.dot_dimension_numbers<[1], [0], [0], [1], [0, 0, 1, 1], [], []>} : vector<8x128xf32>, vector<128x128xf32>, vector<8x128xf32> -> vector<8x128xf32>
    %44 = arith.maximumf %41, %43 : vector<8x128xf32>
    %c0_43 = arith.constant 0 : index
    %c384_44 = arith.constant 384 : index
    %45 = vector.load %arg6[%c0_43, %c384_44] : memref<8x512xf32, #tpu.memory_space<vmem>>, vector<8x128xf32>
    %cst_45 = arith.constant dense<0.000000e+00> : vector<8x128xf32>
    %46 = tpu.matmul %45, %0, %cst_45 {dimension_numbers = #tpu.dot_dimension_numbers<[1], [0], [0], [1], [0, 0, 1, 1], [], []>} : vector<8x128xf32>, vector<128x128xf32>, vector<8x128xf32> -> vector<8x128xf32>
    %c1 = arith.constant 1 : index
    %c0_46 = arith.constant 0 : index
    %47 = vector.load %arg4[%c1, %c0_46] : memref<2x128xf32, #tpu.memory_space<vmem>>, vector<1x128xf32>
    %48 = vector.broadcast %47 : vector<1x128xf32> to vector<8x128xf32>
    %49 = arith.addf %46, %48 : vector<8x128xf32>
    %50 = arith.maximumf %44, %49 : vector<8x128xf32>
    %c0_47 = arith.constant 0 : index
    %c0_48 = arith.constant 0 : index
    %51 = vector.load %arg1[%c0_47, %c0_48] : memref<8x512xf32, #tpu.memory_space<vmem>>, vector<8x512xf32>
    %c416_i32 = arith.constant 416 : i32
    %52 = tpu.dynamic_rotate %51 by %c416_i32 dim 1 : vector<8x512xf32>, i32 -> vector<8x512xf32>
    %c0_49 = arith.constant 0 : index
    %c0_50 = arith.constant 0 : index
    %53 = vector.load %arg6[%c0_49, %c0_50] : memref<8x512xf32, #tpu.memory_space<vmem>>, vector<8x512xf32>
    tpu.vector_store %arg6[%c0_49, %c0_50], %52 {strides = array<i32>} : memref<8x512xf32, #tpu.memory_space<vmem>>, vector<8x512xf32>,
    %c0_51 = arith.constant 0 : index
    %c0_52 = arith.constant 0 : index
    %54 = vector.load %arg6[%c0_51, %c0_52] : memref<8x512xf32, #tpu.memory_space<vmem>>, vector<8x128xf32>
    %cst_53 = arith.constant dense<0.000000e+00> : vector<8x128xf32>
    %55 = tpu.matmul %54, %0, %cst_53 {dimension_numbers = #tpu.dot_dimension_numbers<[1], [0], [0], [1], [0, 0, 1, 1], [], []>} : vector<8x128xf32>, vector<128x128xf32>, vector<8x128xf32> -> vector<8x128xf32>
    %56 = arith.maximumf %50, %55 : vector<8x128xf32>
    %c0_54 = arith.constant 0 : index
    %c128_55 = arith.constant 128 : index
    %57 = vector.load %arg6[%c0_54, %c128_55] : memref<8x512xf32, #tpu.memory_space<vmem>>, vector<8x128xf32>
    %cst_56 = arith.constant dense<0.000000e+00> : vector<8x128xf32>
    %58 = tpu.matmul %57, %0, %cst_56 {dimension_numbers = #tpu.dot_dimension_numbers<[1], [0], [0], [1], [0, 0, 1, 1], [], []>} : vector<8x128xf32>, vector<128x128xf32>, vector<8x128xf32> -> vector<8x128xf32>
    %59 = arith.maximumf %56, %58 : vector<8x128xf32>
    %c0_57 = arith.constant 0 : index
    %c256_58 = arith.constant 256 : index
    %60 = vector.load %arg6[%c0_57, %c256_58] : memref<8x512xf32, #tpu.memory_space<vmem>>, vector<8x128xf32>
    %cst_59 = arith.constant dense<0.000000e+00> : vector<8x128xf32>
    %61 = tpu.matmul %60, %0, %cst_59 {dimension_numbers = #tpu.dot_dimension_numbers<[1], [0], [0], [1], [0, 0, 1, 1], [], []>} : vector<8x128xf32>, vector<128x128xf32>, vector<8x128xf32> -> vector<8x128xf32>
    %62 = arith.maximumf %59, %61 : vector<8x128xf32>
    %63 = vector.broadcast %1 : vector<1x128xf32> to vector<8x128xf32>
    %64 = arith.addf %62, %63 : vector<8x128xf32>
    %cst_60 = arith.constant 0.000000e+00 : f32
    %65 = vector.broadcast %cst_60 : f32 to vector<8x128xf32>
    %66 = arith.maximumf %64, %65 : vector<8x128xf32>
    %c0_61 = arith.constant 0 : index
    %c0_62 = arith.constant 0 : index
    %67 = vector.load %arg5[%c0_61, %c0_62] : memref<8x128xf32, #tpu.memory_space<vmem>>, vector<8x128xf32>
    tpu.vector_store %arg5[%c0_61, %c0_62], %66 {strides = array<i32>} : memref<8x128xf32, #tpu.memory_space<vmem>>, vector<8x128xf32>,
    return
  }
  func.func @transform_0(%arg0: i32) -> (i32, i32) {
    %c0_i32 = arith.constant 0 : i32
    %c0_i32_0 = arith.constant 0 : i32
    return %arg0, %c0_i32 : i32, i32
  }
  func.func @transform_1(%arg0: i32) -> (i32, i32) {
    %c0_i32 = arith.constant 0 : i32
    %c0_i32_0 = arith.constant 0 : i32
    %c0_i32_1 = arith.constant 0 : i32
    return %c0_i32, %c0_i32_0 : i32, i32
  }
  func.func @transform_2(%arg0: i32) -> (i32, i32) {
    %c0_i32 = arith.constant 0 : i32
    %c0_i32_0 = arith.constant 0 : i32
    %c0_i32_1 = arith.constant 0 : i32
    return %c0_i32, %c0_i32_0 : i32, i32
  }
  func.func @transform_3(%arg0: i32) -> (i32, i32) {
    %c0_i32 = arith.constant 0 : i32
    %c0_i32_0 = arith.constant 0 : i32
    %c0_i32_1 = arith.constant 0 : i32
    return %c0_i32, %c0_i32_0 : i32, i32
  }
  func.func @transform_4(%arg0: i32) -> (i32, i32) {
    %c0_i32 = arith.constant 0 : i32
    %c0_i32_0 = arith.constant 0 : i32
    return %arg0, %c0_i32 : i32, i32
  }
}

</mosaic_0001>

<llo_original>
// kernel: tpu_custom_call.1
$region0: #{tpu_custom_call.1}
  #allocation0 [shape = 'u32[]', space=smem, size = 0x4, offset = 0x4, fixed_abs, tag = 'smem constant byte address 0x4 - core index']
  #allocation1 [shape = 'u32[144,128]{1,0:T(1,128)}', space=vmem, size = 0x12000, scoped, tag = 'internal scratch']
  #allocation2 [shape = 'f32[8,512]{1,0:T(8,128)}', space=vmem, size = 0x4000, scoped, tag = 'scratch operand']
  %s0 = inlined_call_operand.hbm [shape: f32[16,512], index: 0, kind: input, shape index: {}]
  %s1 = inlined_call_operand.hbm [shape: f32[128,128], index: 1, kind: input, shape index: {}]
  %s2 = inlined_call_operand.vmem [shape: f32[1,128], index: 2, kind: input, shape index: {}]
  %s3 = inlined_call_operand.vmem [shape: f32[2,128], index: 3, kind: input, shape index: {}]
  %s4 = inlined_call_operand.hbm [shape: f32[16,128], index: 4, kind: output, shape index: {}]
  %s5 = sld [smem:[#allocation0]]
  $region57: #{tpu_custom_call.1} parent=0
    _
  %s7 = ssub.s32 1, %s5
  %s8 = scalar_select 0, %s7, %s5
  $region1: #{tpu_custom_call.1} parent=0
    #allocation3 [shape = 'u8[32768]{0}', space=vmem, size = 0x8000, scoped, tag = 'input window, operand 0']
    #allocation4 [shape = 's32[2]{0}', space=sflag, size = 0x8, scoped, tag = 'scoped memory for tpu_custom_call.1']
    #allocation5 [shape = 's32[2]{0}', space=sflag, size = 0x8, scoped, tag = 'scoped memory for tpu_custom_call.1']
    #allocation6 [shape = 'u8[65536]{0}', space=vmem, size = 0x10000, scoped, tag = 'input window, operand 1, single buffered']
    #allocation7 [shape = 's32[1]{0}', space=sflag, size = 0x4, scoped, tag = 'scoped memory for tpu_custom_call.1']
    #allocation8 [shape = 'u8[8192]{0}', space=vmem, size = 0x2000, scoped, tag = 'output window, operand 0']
    %9 = vsyncpa [#allocation4], 0
    %s10 = scalar_lea.sflag [#allocation4], 1
    %11 = vsyncpa %s10, 0
    %12 = vsyncpa [#allocation7], 0
    %13 = vsyncpa [#allocation5], 0
    %s14 = scalar_lea.sflag [#allocation5], 1
    %15 = vsyncpa %s14, 0
    loop: start=0, step=1, limit=4
    $region2: #{tpu_custom_call.1} parent=1 // loop_pre_header
      _
    $region3: #{tpu_custom_call.1} parent=1 // loop_header
      %s17 = sphi 0, %s21
      %p18 = scmp.ge.s32.totalorder %s17, 4
      %s27 = sphi 0, %s29
      %s30 = sphi 0, %s27
      %s31 = sphi 0, %s30
      %s47 = sphi 0, %s31
      %s51 = sphi 0, %s51
      %s53 = sphi 0, %s51
      %s54 = sphi 0, %s53
      %s68 = sphi 0, %s54
      %s72 = sphi 0, %s72
      %s74 = sphi 0, %s72
      %s75 = sphi 0, %s74
      %s89 = sphi 0, %s75
      %s93 = sphi 0, %s93
      %s95 = sphi 0, %s93
      %s96 = sphi 0, %s95
      %s110 = sphi 0, %s96
      %s116 = sphi 0, %s118
      %s119 = sphi 0, %s116
      %s120 = sphi 0, %s119
      %s136 = sphi 0, %s120
    $region4: #{tpu_custom_call.1} parent=1 // loop_header_branch
      %20 = sbr.rel (%p18) target = $region8
    $region5: #{tpu_custom_call.1} parent=1 // loop_body
      %s22 = ssub.s32 %s17, 1
      %s23 = ssub.s32 %s17, 2
      %s24 = sadd.s32 %s17, 1
      %s25 = ssub.s32 %s17, %s24
      %p26 = scmp.eq.s32.totalorder %s25, 0
      %s28 = sadd.s32 %s27, 1
      %s29 = scalar_select %p26, %s27, %s28
      %p32 = pneg %p26
      %p33 = scmp.eq.s32.totalorder %s17, 1
      %p34 = por %p32, %p33
      %p35 = scmp.ne.s32.totalorder %s27, %s30
      %p36 = scmp.eq.s32.totalorder %s17, 0
      %p37 = por %p35, %p36
      %p38 = scmp.ne.s32.totalorder %s27, %s30
      %p39 = scmp.eq.s32.totalorder %s22, 1
      %p40 = por %p38, %p39
      %p41 = scmp.ne.s32.totalorder %s30, %s31
      %p42 = scmp.eq.s32.totalorder %s22, 0
      %p43 = por %p41, %p42
      %p44 = scmp.ne.s32.totalorder %s30, %s31
      %p45 = scmp.eq.s32.totalorder %s23, 1
      %p46 = por %p44, %p45
      %p48 = scmp.ne.s32.totalorder %s31, %s47
      %p49 = scmp.eq.s32.totalorder %s23, 0
      %p50 = por %p48, %p49
      %s52 = sadd.s32 %s51, 1
      %p55 = scmp.eq.s32.totalorder %s17, 1
      %p56 = scmp.ne.s32.totalorder %s51, %s53
      %p57 = scmp.eq.s32.totalorder %s17, 0
      %p58 = por %p56, %p57
      %p59 = scmp.ne.s32.totalorder %s51, %s53
      %p60 = scmp.eq.s32.totalorder %s22, 1
      %p61 = por %p59, %p60
      %p62 = scmp.ne.s32.totalorder %s53, %s54
      %p63 = scmp.eq.s32.totalorder %s22, 0
      %p64 = por %p62, %p63
      %p65 = scmp.ne.s32.totalorder %s53, %s54
      %p66 = scmp.eq.s32.totalorder %s23, 1
      %p67 = por %p65, %p66
      %p69 = scmp.ne.s32.totalorder %s54, %s68
      %p70 = scmp.eq.s32.totalorder %s23, 0
      %p71 = por %p69, %p70
      %s73 = sadd.s32 %s72, 1
      %p76 = scmp.eq.s32.totalorder %s17, 1
      %p77 = scmp.ne.s32.totalorder %s72, %s74
      %p78 = scmp.eq.s32.totalorder %s17, 0
      %p79 = por %p77, %p78
      %p80 = scmp.ne.s32.totalorder %s72, %s74
      %p81 = scmp.eq.s32.totalorder %s22, 1
      %p82 = por %p80, %p81
      %p83 = scmp.ne.s32.totalorder %s74, %s75
      %p84 = scmp.eq.s32.totalorder %s22, 0
      %p85 = por %p83, %p84
      %p86 = scmp.ne.s32.totalorder %s74, %s75
      %p87 = scmp.eq.s32.totalorder %s23, 1
      %p88 = por %p86, %p87
      %p90 = scmp.ne.s32.totalorder %s75, %s89
      %p91 = scmp.eq.s32.totalorder %s23, 0
      %p92 = por %p90, %p91
      %s94 = sadd.s32 %s93, 1
      %p97 = scmp.eq.s32.totalorder %s17, 1
      %p98 = scmp.ne.s32.totalorder %s93, %s95
      %p99 = scmp.eq.s32.totalorder %s17, 0
      %p100 = por %p98, %p99
      %p101 = scmp.ne.s32.totalorder %s93, %s95
      %p102 = scmp.eq.s32.totalorder %s22, 1
      %p103 = por %p101, %p102
      %p104 = scmp.ne.s32.totalorder %s95, %s96
      %p105 = scmp.eq.s32.totalorder %s22, 0
      %p106 = por %p104, %p105
      %p107 = scmp.ne.s32.totalorder %s95, %s96
      %p108 = scmp.eq.s32.totalorder %s23, 1
      %p109 = por %p107, %p108
      %p111 = scmp.ne.s32.totalorder %s96, %s110
      %p112 = scmp.eq.s32.totalorder %s23, 0
      %p113 = por %p111, %p112
      %s114 = ssub.s32 %s17, %s24
      %p115 = scmp.eq.s32.totalorder %s114, 0
      %s117 = sadd.s32 %s116, 1
      %s118 = scalar_select %p115, %s116, %s117
      %p121 = pneg %p115
      %p122 = scmp.eq.s32.totalorder %s17, 1
      %p123 = por %p121, %p122
      %p124 = scmp.ne.s32.totalorder %s116, %s119
      %p125 = scmp.eq.s32.totalorder %s17, 0
      %p126 = por %p124, %p125
      %p127 = scmp.ne.s32.totalorder %s116, %s119
      %p128 = scmp.eq.s32.totalorder %s22, 1
      %p129 = por %p127, %p128
      %p130 = scmp.ne.s32.totalorder %s119, %s120
      %p131 = scmp.eq.s32.totalorder %s22, 0
      %p132 = por %p130, %p131
      %p133 = scmp.ne.s32.totalorder %s119, %s120
      %p134 = scmp.eq.s32.totalorder %s23, 1
      %p135 = por %p133, %p134
      %p137 = scmp.ne.s32.totalorder %s120, %s136
      %p138 = scmp.eq.s32.totalorder %s23, 0
      %p139 = por %p137, %p138
      %p140 = scmp.le.s32.totalorder 1, %s17
      %p141 = scmp.lt.s32.totalorder %s17, 3
      %p142 = pnand %p140, %p141
      %p143 = pneg %p142
      // Predicated region
      $region9: #{tpu_custom_call.1} parent=5 // pred_check
        _
      $region10: #{tpu_custom_call.1} parent=5 // pred_check_branch
        %145 = sbr.rel (%p142) target = $region12
      $region11: #{tpu_custom_call.1} parent=5 // pred_region
        %s146 = ssub.s32 %s17, 1
        // Predicated region
        $region13: #{tpu_custom_call.1} parent=11 // pred_check
          %p147 = pneg %p64
        $region14: #{tpu_custom_call.1} parent=11 // pred_check_branch
          %149 = sbr.rel (%p147) target = $region16
        $region15: #{tpu_custom_call.1} parent=11 // pred_region
          %s151 = ssub.s32 2048, 2048
          %152 = vsyncadd [#allocation7], %s151
          %s153 = sshll.u32 [#allocation6], 4
          %s154 = int_to_ptr.vmem [resolvable:$true] %s153
          %159 = dma.hbm_to_vmem [thread:$0]  %s1, 2048, %s154, [#allocation7], 128, 128, 8
        $region16: #{tpu_custom_call.1} parent=11 // pred_fallthru
          _
        // Predicated region
        $region17: #{tpu_custom_call.1} parent=11 // pred_check
          %p160 = pneg %p85
        $region18: #{tpu_custom_call.1} parent=11 // pred_check_branch
          %162 = sbr.rel (%p160) target = $region20
        $region19: #{tpu_custom_call.1} parent=11 // pred_region
          _
        $region20: #{tpu_custom_call.1} parent=11 // pred_fallthru
          _
        // Predicated region
        $region21: #{tpu_custom_call.1} parent=11 // pred_check
          %p163 = pneg %p106
        $region22: #{tpu_custom_call.1} parent=11 // pred_check_branch
          %165 = sbr.rel (%p163) target = $region24
        $region23: #{tpu_custom_call.1} parent=11 // pred_region
          _
        $region24: #{tpu_custom_call.1} parent=11 // pred_fallthru
          _
      $region12: #{tpu_custom_call.1} parent=5 // pred_fallthru
        _
      %p166 = scmp.lt.s32.totalorder %s17, 2
      // Predicated region
      $region25: #{tpu_custom_call.1} parent=5 // pred_check
        %p167 = pneg %p166
      $region26: #{tpu_custom_call.1} parent=5 // pred_check_branch
        %169 = sbr.rel (%p167) target = $region28
      $region27: #{tpu_custom_call.1} parent=5 // pred_region
        // Predicated region
        $region29: #{tpu_custom_call.1} parent=27 // pred_check
          %p170 = pneg %p37
        $region30: #{tpu_custom_call.1} parent=27 // pred_check_branch
          %172 = sbr.rel (%p170) target = $region32
        $region31: #{tpu_custom_call.1} parent=27 // pred_region
          %s173 = sand.u32 %s27, 1
          %s174 = scalar_lea.sflag [#allocation4], %s173
          %s175 = sand.u32 %s27, 1
          %s176 = smul.addr %s175, 32
          %s177 = scalar_lea.vmem [#allocation3], %s176
          %s179 = ssub.s32 512, 512
          %180 = vsyncadd %s174, %s179
          %s181 = smul.addr %s17, 4
          %s182 = smul.addr %s181, 128
          %s183 = scalar_lea.hbm %s0, %s182
          %s185 = sshll.u32 %s177, 4
          %s186 = int_to_ptr.vmem [resolvable:$true] %s185
          %188 = dma.hbm_to_vmem [thread:$0]  %s183, 512, %s186, %s174
        $region32: #{tpu_custom_call.1} parent=27 // pred_fallthru
          _
      $region28: #{tpu_custom_call.1} parent=5 // pred_fallthru
        _
      %p189 = scmp.le.s32.totalorder 1, %s17
      %p190 = scmp.lt.s32.totalorder %s17, 3
      %p191 = pnand %p189, %p190
      %p192 = pneg %p191
      // Predicated region
      $region33: #{tpu_custom_call.1} parent=5 // pred_check
        _
      $region34: #{tpu_custom_call.1} parent=5 // pred_check_branch
        %194 = sbr.rel (%p191) target = $region36
      $region35: #{tpu_custom_call.1} parent=5 // pred_region
        %s195 = ssub.s32 %s17, 1
        %s196 = sand.u32 %s30, 1
        %s197 = scalar_lea.sflag [#allocation4], %s196
        %s198 = sand.u32 %s30, 1
        %s199 = smul.addr %s198, 32
        %s200 = scalar_lea.vmem [#allocation3], %s199
        // Predicated region
        $region37: #{tpu_custom_call.1} parent=35 // pred_check
          %p201 = pneg %p43
        $region38: #{tpu_custom_call.1} parent=35 // pred_check_branch
          %203 = sbr.rel (%p201) target = $region40
        $region39: #{tpu_custom_call.1} parent=35 // pred_region
          %204 = dma.done %s197, 512
        $region40: #{tpu_custom_call.1} parent=35 // pred_fallthru
          _
        // Predicated region
        $region41: #{tpu_custom_call.1} parent=35 // pred_check
          %p205 = pneg %p64
        $region42: #{tpu_custom_call.1} parent=35 // pred_check_branch
          %207 = sbr.rel (%p205) target = $region44
        $region43: #{tpu_custom_call.1} parent=35 // pred_region
          %208 = dma.done [#allocation7], 2048
        $region44: #{tpu_custom_call.1} parent=35 // pred_fallthru
          _
        %s209 = sand.u32 %s30, 1
        %s210 = scalar_lea.sflag [#allocation4], %s209
        %s211 = sand.u32 %s30, 1
        %s212 = smul.addr %s211, 32
        %s213 = scalar_lea.vmem [#allocation3], %s212
        %p214 = pneg %p43
        %p215 = pneg %p40
        %p216 = pneg %p64
        %p217 = pneg %p61
        %p218 = pneg %p85
        %p219 = pneg %p82
        %p220 = pneg %p106
        %p221 = pneg %p103
        %p222 = pneg %p132
        %p223 = pneg %p129
        %s224 = sand.u32 %s119, 1
        %s225 = scalar_lea.sflag [#allocation5], %s224
        %s226 = sand.u32 %s119, 1
        %s227 = smul.addr %s226, 8
        %s228 = scalar_lea.vmem [#allocation8], %s227
        %v229 = vld [vmem:[#allocation6] sm:$0xff]
        %v230 = vld [vmem:[#allocation6 + $0x8] sm:$0xff]
        %v231 = vld [vmem:[#allocation6 + $0x10] sm:$0xff]
        %v232 = vld [vmem:[#allocation6 + $0x18] sm:$0xff]
        %v233 = vld [vmem:[#allocation6 + $0x20] sm:$0xff]
        %v234 = vld [vmem:[#allocation6 + $0x28] sm:$0xff]
        %v235 = vld [vmem:[#allocation6 + $0x30] sm:$0xff]
        %v236 = vld [vmem:[#allocation6 + $0x38] sm:$0xff]
        %v237 = vld [vmem:[#allocation6 + $0x40] sm:$0xff]
        %v238 = vld [vmem:[#allocation6 + $0x48] sm:$0xff]
        %v239 = vld [vmem:[#allocation6 + $0x50] sm:$0xff]
        %v240 = vld [vmem:[#allocation6 + $0x58] sm:$0xff]
        %v241 = vld [vmem:[#allocation6 + $0x60] sm:$0xff]
        %v242 = vld [vmem:[#allocation6 + $0x68] sm:$0xff]
        %v243 = vld [vmem:[#allocation6 + $0x70] sm:$0xff]
        %v244 = vld [vmem:[#allocation6 + $0x78] sm:$0xff]
        %v245 = vld [vmem:[%s2] sm:$0x1]
        %v246 = vld [vmem:[%s200] sm:$0xff]
        %247 = vmatprep.subr.mxu0 0.0
        %248 = vmatpush1.msra.mxu0 %v244
        %249 = vmatprep.subr.mxu0 0.0
        %250 = vmatpush1.msra.mxu0 %v243
        %251 = vmatprep.subr.mxu0 0.0
        %252 = vmatpush1.msra.mxu0 %v242
        %253 = vmatprep.subr.mxu0 0.0
        %254 = vmatpush1.msra.mxu0 %v241
        %255 = vmatprep.subr.mxu0 0.0
        %256 = vmatpush1.msra.mxu0 %v240
        %257 = vmatprep.subr.mxu0 0.0
        %258 = vmatpush1.msra.mxu0 %v239
        %259 = vmatprep.subr.mxu0 0.0
        %260 = vmatpush1.msra.mxu0 %v238
        %261 = vmatprep.subr.mxu0 0.0
        %262 = vmatpush1.msra.mxu0 %v237
        %263 = vmatprep.subr.mxu0 0.0
        %264 = vmatpush1.msra.mxu0 %v236
        %265 = vmatprep.subr.mxu0 0.0
        %266 = vmatpush1.msra.mxu0 %v235
        %267 = vmatprep.subr.mxu0 0.0
        %268 = vmatpush1.msra.mxu0 %v234
        %269 = vmatprep.subr.mxu0 0.0
        %270 = vmatpush1.msra.mxu0 %v233
        %271 = vmatprep.subr.mxu0 0.0
        %272 = vmatpush1.msra.mxu0 %v232
        %273 = vmatprep.subr.mxu0 0.0
        %274 = vmatpush1.msra.mxu0 %v231
        %275 = vmatprep.subr.mxu0 0.0
        %276 = vmatpush1.msra.mxu0 %v230
        %277 = vmatprep.subr.mxu0 0.0
        %278 = vmatpush1.msra.mxu0 %v229
        %279 = vmatprep.subr.mxu0 0.0
        %280 = vmatpush2.msra.mxu0 0.0
        %281 = vmatprep.subr.mxu0 0.0
        %282 = vmatpush2.msra.mxu0 0.0
        %283 = vmatprep.subr.mxu0 0.0
        %284 = vmatpush2.msra.mxu0 0.0
        %285 = vmatprep.subr.mxu0 0.0
        %286 = vmatpush2.msra.mxu0 0.0
        %287 = vmatprep.subr.mxu0 0.0
        %288 = vmatpush2.msra.mxu0 0.0
        %289 = vmatprep.subr.mxu0 0.0
        %290 = vmatpush2.msra.mxu0 0.0
        %291 = vmatprep.subr.mxu0 0.0
        %292 = vmatpush2.msra.mxu0 0.0
        %293 = vmatprep.subr.mxu0 0.0
        %294 = vmatpush2.msra.mxu0 0.0
        %295 = vmatprep.subr.mxu0 0.0
        %296 = vmatpush2.msra.mxu0 0.0
        %297 = vmatprep.subr.mxu0 0.0
        %298 = vmatpush2.msra.mxu0 0.0
        %299 = vmatprep.subr.mxu0 0.0
        %300 = vmatpush2.msra.mxu0 0.0
        %301 = vmatprep.subr.mxu0 0.0
        %302 = vmatpush2.msra.mxu0 0.0
        %303 = vmatprep.subr.mxu0 0.0
        %304 = vmatpush2.msra.mxu0 0.0
        %305 = vmatprep.subr.mxu0 0.0
        %306 = vmatpush2.msra.mxu0 0.0
        %307 = vmatprep.subr.mxu0 0.0
        %308 = vmatpush2.msra.mxu0 0.0
        %309 = vmatprep.subr.mxu0 0.0
        %310 = vmatpush2.msra.mxu0 0.0
        %311 = vmatprep.mubr.f32.mxu0 0.0
        %312 = vmatmul.mubr.f32.gmra.mxu0 %v246
        %v313 = vpop.f32.mrf.mxu0
        %v314 = vadd.f32 0.0, %v313
        %v315 = vpop.f32.mrf.mxu0
        %316 = vdwg.mxu0
        %v317 = vld [vmem:[%s200 + $0x8] sm:$0xff]
        %318 = vmatprep.subr.mxu0 0.0
        %319 = vmatpush1.msra.mxu0 %v244
        %320 = vmatprep.subr.mxu0 0.0
        %321 = vmatpush1.msra.mxu0 %v243
        %322 = vmatprep.subr.mxu0 0.0
        %323 = vmatpush1.msra.mxu0 %v242
        %324 = vmatprep.subr.mxu0 0.0
        %325 = vmatpush1.msra.mxu0 %v241
        %326 = vmatprep.subr.mxu0 0.0
        %327 = vmatpush1.msra.mxu0 %v240
        %328 = vmatprep.subr.mxu0 0.0
        %329 = vmatpush1.msra.mxu0 %v239
        %330 = vmatprep.subr.mxu0 0.0
        %331 = vmatpush1.msra.mxu0 %v238
        %332 = vmatprep.subr.mxu0 0.0
        %333 = vmatpush1.msra.mxu0 %v237
        %334 = vmatprep.subr.mxu0 0.0
        %335 = vmatpush1.msra.mxu0 %v236
        %336 = vmatprep.subr.mxu0 0.0
        %337 = vmatpush1.msra.mxu0 %v235
        %338 = vmatprep.subr.mxu0 0.0
        %339 = vmatpush1.msra.mxu0 %v234
        %340 = vmatprep.subr.mxu0 0.0
        %341 = vmatpush1.msra.mxu0 %v233
        %342 = vmatprep.subr.mxu0 0.0
        %343 = vmatpush1.msra.mxu0 %v232
        %344 = vmatprep.subr.mxu0 0.0
        %345 = vmatpush1.msra.mxu0 %v231
        %346 = vmatprep.subr.mxu0 0.0
        %347 = vmatpush1.msra.mxu0 %v230
        %348 = vmatprep.subr.mxu0 0.0
        %349 = vmatpush1.msra.mxu0 %v229
        %350 = vmatprep.subr.mxu0 0.0
        %351 = vmatpush2.msra.mxu0 0.0
        %352 = vmatprep.subr.mxu0 0.0
        %353 = vmatpush2.msra.mxu0 0.0
        %354 = vmatprep.subr.mxu0 0.0
        %355 = vmatpush2.msra.mxu0 0.0
        %356 = vmatprep.subr.mxu0 0.0
        %357 = vmatpush2.msra.mxu0 0.0
        %358 = vmatprep.subr.mxu0 0.0
        %359 = vmatpush2.msra.mxu0 0.0
        %360 = vmatprep.subr.mxu0 0.0
        %361 = vmatpush2.msra.mxu0 0.0
        %362 = vmatprep.subr.mxu0 0.0
        %363 = vmatpush2.msra.mxu0 0.0
        %364 = vmatprep.subr.mxu0 0.0
        %365 = vmatpush2.msra.mxu0 0.0
        %366 = vmatprep.subr.mxu0 0.0
        %367 = vmatpush2.msra.mxu0 0.0
        %368 = vmatprep.subr.mxu0 0.0
        %369 = vmatpush2.msra.mxu0 0.0
        %370 = vmatprep.subr.mxu0 0.0
        %371 = vmatpush2.msra.mxu0 0.0
        %372 = vmatprep.subr.mxu0 0.0
        %373 = vmatpush2.msra.mxu0 0.0
        %374 = vmatprep.subr.mxu0 0.0
        %375 = vmatpush2.msra.mxu0 0.0
        %376 = vmatprep.subr.mxu0 0.0
        %377 = vmatpush2.msra.mxu0 0.0
        %378 = vmatprep.subr.mxu0 0.0
        %379 = vmatpush2.msra.mxu0 0.0
        %380 = vmatprep.subr.mxu0 0.0
        %381 = vmatpush2.msra.mxu0 0.0
        %382 = vmatprep.mubr.f32.mxu0 0.0
        %383 = vmatmul.mubr.f32.gmra.mxu0 %v317
        %v384 = vpop.f32.mrf.mxu0
        %v385 = vadd.f32 0.0, %v384
        %v386 = vpop.f32.mrf.mxu0
        %387 = vdwg.mxu0
        %v388 = vmax.f32 %v314, %v385
        %v389 = vld [vmem:[%s200 + $0x10] sm:$0xff]
        %390 = vmatprep.subr.mxu0 0.0
        %391 = vmatpush1.msra.mxu0 %v244
        %392 = vmatprep.subr.mxu0 0.0
        %393 = vmatpush1.msra.mxu0 %v243
        %394 = vmatprep.subr.mxu0 0.0
        %395 = vmatpush1.msra.mxu0 %v242
        %396 = vmatprep.subr.mxu0 0.0
        %397 = vmatpush1.msra.mxu0 %v241
        %398 = vmatprep.subr.mxu0 0.0
        %399 = vmatpush1.msra.mxu0 %v240
        %400 = vmatprep.subr.mxu0 0.0
        %401 = vmatpush1.msra.mxu0 %v239
        %402 = vmatprep.subr.mxu0 0.0
        %403 = vmatpush1.msra.mxu0 %v238
        %404 = vmatprep.subr.mxu0 0.0
        %405 = vmatpush1.msra.mxu0 %v237
        %406 = vmatprep.subr.mxu0 0.0
        %407 = vmatpush1.msra.mxu0 %v236
        %408 = vmatprep.subr.mxu0 0.0
        %409 = vmatpush1.msra.mxu0 %v235
        %410 = vmatprep.subr.mxu0 0.0
        %411 = vmatpush1.msra.mxu0 %v234
        %412 = vmatprep.subr.mxu0 0.0
        %413 = vmatpush1.msra.mxu0 %v233
        %414 = vmatprep.subr.mxu0 0.0
        %415 = vmatpush1.msra.mxu0 %v232
        %416 = vmatprep.subr.mxu0 0.0
        %417 = vmatpush1.msra.mxu0 %v231
        %418 = vmatprep.subr.mxu0 0.0
        %419 = vmatpush1.msra.mxu0 %v230
        %420 = vmatprep.subr.mxu0 0.0
        %421 = vmatpush1.msra.mxu0 %v229
        %422 = vmatprep.subr.mxu0 0.0
        %423 = vmatpush2.msra.mxu0 0.0
        %424 = vmatprep.subr.mxu0 0.0
        %425 = vmatpush2.msra.mxu0 0.0
        %426 = vmatprep.subr.mxu0 0.0
        %427 = vmatpush2.msra.mxu0 0.0
        %428 = vmatprep.subr.mxu0 0.0
        %429 = vmatpush2.msra.mxu0 0.0
        %430 = vmatprep.subr.mxu0 0.0
        %431 = vmatpush2.msra.mxu0 0.0
        %432 = vmatprep.subr.mxu0 0.0
        %433 = vmatpush2.msra.mxu0 0.0
        %434 = vmatprep.subr.mxu0 0.0
        %435 = vmatpush2.msra.mxu0 0.0
        %436 = vmatprep.subr.mxu0 0.0
        %437 = vmatpush2.msra.mxu0 0.0
        %438 = vmatprep.subr.mxu0 0.0
        %439 = vmatpush2.msra.mxu0 0.0
        %440 = vmatprep.subr.mxu0 0.0
        %441 = vmatpush2.msra.mxu0 0.0
        %442 = vmatprep.subr.mxu0 0.0
        %443 = vmatpush2.msra.mxu0 0.0
        %444 = vmatprep.subr.mxu0 0.0
        %445 = vmatpush2.msra.mxu0 0.0
        %446 = vmatprep.subr.mxu0 0.0
        %447 = vmatpush2.msra.mxu0 0.0
        %448 = vmatprep.subr.mxu0 0.0
        %449 = vmatpush2.msra.mxu0 0.0
        %450 = vmatprep.subr.mxu0 0.0
        %451 = vmatpush2.msra.mxu0 0.0
        %452 = vmatprep.subr.mxu0 0.0
        %453 = vmatpush2.msra.mxu0 0.0
        %454 = vmatprep.mubr.f32.mxu0 0.0
        %455 = vmatmul.mubr.f32.gmra.mxu0 %v389
        %v456 = vpop.f32.mrf.mxu0
        %v457 = vadd.f32 0.0, %v456
        %v458 = vpop.f32.mrf.mxu0
        %459 = vdwg.mxu0
        %v460 = vmax.f32 %v388, %v457
        %v461 = vld [vmem:[%s200 + $0x18] sm:$0xff]
        %462 = vmatprep.subr.mxu0 0.0
        %463 = vmatpush1.msra.mxu0 %v244
        %464 = vmatprep.subr.mxu0 0.0
        %465 = vmatpush1.msra.mxu0 %v243
        %466 = vmatprep.subr.mxu0 0.0
        %467 = vmatpush1.msra.mxu0 %v242
        %468 = vmatprep.subr.mxu0 0.0
        %469 = vmatpush1.msra.mxu0 %v241
        %470 = vmatprep.subr.mxu0 0.0
        %471 = vmatpush1.msra.mxu0 %v240
        %472 = vmatprep.subr.mxu0 0.0
        %473 = vmatpush1.msra.mxu0 %v239
        %474 = vmatprep.subr.mxu0 0.0
        %475 = vmatpush1.msra.mxu0 %v238
        %476 = vmatprep.subr.mxu0 0.0
        %477 = vmatpush1.msra.mxu0 %v237
        %478 = vmatprep.subr.mxu0 0.0
        %479 = vmatpush1.msra.mxu0 %v236
        %480 = vmatprep.subr.mxu0 0.0
        %481 = vmatpush1.msra.mxu0 %v235
        %482 = vmatprep.subr.mxu0 0.0
        %483 = vmatpush1.msra.mxu0 %v234
        %484 = vmatprep.subr.mxu0 0.0
        %485 = vmatpush1.msra.mxu0 %v233
        %486 = vmatprep.subr.mxu0 0.0
        %487 = vmatpush1.msra.mxu0 %v232
        %488 = vmatprep.subr.mxu0 0.0
        %489 = vmatpush1.msra.mxu0 %v231
        %490 = vmatprep.subr.mxu0 0.0
        %491 = vmatpush1.msra.mxu0 %v230
        %492 = vmatprep.subr.mxu0 0.0
        %493 = vmatpush1.msra.mxu0 %v229
        %494 = vmatprep.subr.mxu0 0.0
        %495 = vmatpush2.msra.mxu0 0.0
        %496 = vmatprep.subr.mxu0 0.0
        %497 = vmatpush2.msra.mxu0 0.0
        %498 = vmatprep.subr.mxu0 0.0
        %499 = vmatpush2.msra.mxu0 0.0
        %500 = vmatprep.subr.mxu0 0.0
        %501 = vmatpush2.msra.mxu0 0.0
        %502 = vmatprep.subr.mxu0 0.0
        %503 = vmatpush2.msra.mxu0 0.0
        %504 = vmatprep.subr.mxu0 0.0
        %505 = vmatpush2.msra.mxu0 0.0
        %506 = vmatprep.subr.mxu0 0.0
        %507 = vmatpush2.msra.mxu0 0.0
        %508 = vmatprep.subr.mxu0 0.0
        %509 = vmatpush2.msra.mxu0 0.0
        %510 = vmatprep.subr.mxu0 0.0
        %511 = vmatpush2.msra.mxu0 0.0
        %512 = vmatprep.subr.mxu0 0.0
        %513 = vmatpush2.msra.mxu0 0.0
        %514 = vmatprep.subr.mxu0 0.0
        %515 = vmatpush2.msra.mxu0 0.0
        %516 = vmatprep.subr.mxu0 0.0
        %517 = vmatpush2.msra.mxu0 0.0
        %518 = vmatprep.subr.mxu0 0.0
        %519 = vmatpush2.msra.mxu0 0.0
        %520 = vmatprep.subr.mxu0 0.0
        %521 = vmatpush2.msra.mxu0 0.0
        %522 = vmatprep.subr.mxu0 0.0
        %523 = vmatpush2.msra.mxu0 0.0
        %524 = vmatprep.subr.mxu0 0.0
        %525 = vmatpush2.msra.mxu0 0.0
        %526 = vmatprep.mubr.f32.mxu0 0.0
        %527 = vmatmul.mubr.f32.gmra.mxu0 %v461
        %v528 = vpop.f32.mrf.mxu0
        %v529 = vadd.f32 0.0, %v528
        %v530 = vpop.f32.mrf.mxu0
        %531 = vdwg.mxu0
        %v532 = vmax.f32 %v460, %v529
        %v533 = vld [vmem:[%s200] sm:$0xff]
        %v534 = vld [vmem:[%s200 + $0x8] sm:$0xff]
        %v535 = vld [vmem:[%s200 + $0x10] sm:$0xff]
        %536 = vrot.lane.b32.xlu0 %v533, 96
        %v537 = vpop.permute.xlu0 %536
        %538 = vrot.lane.b32.xlu0 %v534, 96
        %v539 = vpop.permute.xlu0 %538
        %540 = vrot.lane.b32.xlu0 %v535, 96
        %v541 = vpop.permute.xlu0 %540
        %542 = vrot.lane.b32.xlu0 %v461, 96
        %v543 = vpop.permute.xlu0 %542
        %v544 = vlaneseq
        %v545 = vand.u32 %v544, 127
        %vm546 = vcmp.lt.s32.totalorder %v545, 96
        %v547 = vsel %vm546, %v541, %v543
        %v548 = vsel %vm546, %v539, %v541
        %v549 = vsel %vm546, %v537, %v539
        %v550 = vsel %vm546, %v543, %v537
        %551 = vst [vmem:[#allocation2] sm:$0xff] %v549
        %552 = vst [vmem:[#allocation2 + $0x8] sm:$0xff] %v548
        %553 = vst [vmem:[#allocation2 + $0x10] sm:$0xff] %v547
        %554 = vst [vmem:[#allocation2 + $0x18] sm:$0xff] %v550
        %v555 = vld [vmem:[#allocation2] sm:$0xff]
        %556 = vmatprep.subr.mxu0 0.0
        %557 = vmatpush1.msra.mxu0 %v244
        %558 = vmatprep.subr.mxu0 0.0
        %559 = vmatpush1.msra.mxu0 %v243
        %560 = vmatprep.subr.mxu0 0.0
        %561 = vmatpush1.msra.mxu0 %v242
        %562 = vmatprep.subr.mxu0 0.0
        %563 = vmatpush1.msra.mxu0 %v241
        %564 = vmatprep.subr.mxu0 0.0
        %565 = vmatpush1.msra.mxu0 %v240
        %566 = vmatprep.subr.mxu0 0.0
        %567 = vmatpush1.msra.mxu0 %v239
        %568 = vmatprep.subr.mxu0 0.0
        %569 = vmatpush1.msra.mxu0 %v238
        %570 = vmatprep.subr.mxu0 0.0
        %571 = vmatpush1.msra.mxu0 %v237
        %572 = vmatprep.subr.mxu0 0.0
        %573 = vmatpush1.msra.mxu0 %v236
        %574 = vmatprep.subr.mxu0 0.0
        %575 = vmatpush1.msra.mxu0 %v235
        %576 = vmatprep.subr.mxu0 0.0
        %577 = vmatpush1.msra.mxu0 %v234
        %578 = vmatprep.subr.mxu0 0.0
        %579 = vmatpush1.msra.mxu0 %v233
        %580 = vmatprep.subr.mxu0 0.0
        %581 = vmatpush1.msra.mxu0 %v232
        %582 = vmatprep.subr.mxu0 0.0
        %583 = vmatpush1.msra.mxu0 %v231
        %584 = vmatprep.subr.mxu0 0.0
        %585 = vmatpush1.msra.mxu0 %v230
        %586 = vmatprep.subr.mxu0 0.0
        %587 = vmatpush1.msra.mxu0 %v229
        %588 = vmatprep.subr.mxu0 0.0
        %589 = vmatpush2.msra.mxu0 0.0
        %590 = vmatprep.subr.mxu0 0.0
        %591 = vmatpush2.msra.mxu0 0.0
        %592 = vmatprep.subr.mxu0 0.0
        %593 = vmatpush2.msra.mxu0 0.0
        %594 = vmatprep.subr.mxu0 0.0
        %595 = vmatpush2.msra.mxu0 0.0
        %596 = vmatprep.subr.mxu0 0.0
        %597 = vmatpush2.msra.mxu0 0.0
        %598 = vmatprep.subr.mxu0 0.0
        %599 = vmatpush2.msra.mxu0 0.0
        %600 = vmatprep.subr.mxu0 0.0
        %601 = vmatpush2.msra.mxu0 0.0
        %602 = vmatprep.subr.mxu0 0.0
        %603 = vmatpush2.msra.mxu0 0.0
        %604 = vmatprep.subr.mxu0 0.0
        %605 = vmatpush2.msra.mxu0 0.0
        %606 = vmatprep.subr.mxu0 0.0
        %607 = vmatpush2.msra.mxu0 0.0
        %608 = vmatprep.subr.mxu0 0.0
        %609 = vmatpush2.msra.mxu0 0.0
        %610 = vmatprep.subr.mxu0 0.0
        %611 = vmatpush2.msra.mxu0 0.0
        %612 = vmatprep.subr.mxu0 0.0
        %613 = vmatpush2.msra.mxu0 0.0
        %614 = vmatprep.subr.mxu0 0.0
        %615 = vmatpush2.msra.mxu0 0.0
        %616 = vmatprep.subr.mxu0 0.0
        %617 = vmatpush2.msra.mxu0 0.0
        %618 = vmatprep.subr.mxu0 0.0
        %619 = vmatpush2.msra.mxu0 0.0
        %620 = vmatprep.mubr.f32.mxu0 0.0
        %621 = vmatmul.mubr.f32.gmra.mxu0 %v555
        %v622 = vpop.f32.mrf.mxu0
        %v623 = vadd.f32 0.0, %v622
        %v624 = vpop.f32.mrf.mxu0
        %625 = vdwg.mxu0
        %v626 = vmax.f32 %v532, %v623
        %v627 = vld [vmem:[#allocation2 + $0x8] sm:$0xff]
        %628 = vmatprep.subr.mxu0 0.0
        %629 = vmatpush1.msra.mxu0 %v244
        %630 = vmatprep.subr.mxu0 0.0
        %631 = vmatpush1.msra.mxu0 %v243
        %632 = vmatprep.subr.mxu0 0.0
        %633 = vmatpush1.msra.mxu0 %v242
        %634 = vmatprep.subr.mxu0 0.0
        %635 = vmatpush1.msra.mxu0 %v241
        %636 = vmatprep.subr.mxu0 0.0
        %637 = vmatpush1.msra.mxu0 %v240
        %638 = vmatprep.subr.mxu0 0.0
        %639 = vmatpush1.msra.mxu0 %v239
        %640 = vmatprep.subr.mxu0 0.0
        %641 = vmatpush1.msra.mxu0 %v238
        %642 = vmatprep.subr.mxu0 0.0
        %643 = vmatpush1.msra.mxu0 %v237
        %644 = vmatprep.subr.mxu0 0.0
        %645 = vmatpush1.msra.mxu0 %v236
        %646 = vmatprep.subr.mxu0 0.0
        %647 = vmatpush1.msra.mxu0 %v235
        %648 = vmatprep.subr.mxu0 0.0
        %649 = vmatpush1.msra.mxu0 %v234
        %650 = vmatprep.subr.mxu0 0.0
        %651 = vmatpush1.msra.mxu0 %v233
        %652 = vmatprep.subr.mxu0 0.0
        %653 = vmatpush1.msra.mxu0 %v232
        %654 = vmatprep.subr.mxu0 0.0
        %655 = vmatpush1.msra.mxu0 %v231
        %656 = vmatprep.subr.mxu0 0.0
        %657 = vmatpush1.msra.mxu0 %v230
        %658 = vmatprep.subr.mxu0 0.0
        %659 = vmatpush1.msra.mxu0 %v229
        %660 = vmatprep.subr.mxu0 0.0
        %661 = vmatpush2.msra.mxu0 0.0
        %662 = vmatprep.subr.mxu0 0.0
        %663 = vmatpush2.msra.mxu0 0.0
        %664 = vmatprep.subr.mxu0 0.0
        %665 = vmatpush2.msra.mxu0 0.0
        %666 = vmatprep.subr.mxu0 0.0
        %667 = vmatpush2.msra.mxu0 0.0
        %668 = vmatprep.subr.mxu0 0.0
        %669 = vmatpush2.msra.mxu0 0.0
        %670 = vmatprep.subr.mxu0 0.0
        %671 = vmatpush2.msra.mxu0 0.0
        %672 = vmatprep.subr.mxu0 0.0
        %673 = vmatpush2.msra.mxu0 0.0
        %674 = vmatprep.subr.mxu0 0.0
        %675 = vmatpush2.msra.mxu0 0.0
        %676 = vmatprep.subr.mxu0 0.0
        %677 = vmatpush2.msra.mxu0 0.0
        %678 = vmatprep.subr.mxu0 0.0
        %679 = vmatpush2.msra.mxu0 0.0
        %680 = vmatprep.subr.mxu0 0.0
        %681 = vmatpush2.msra.mxu0 0.0
        %682 = vmatprep.subr.mxu0 0.0
        %683 = vmatpush2.msra.mxu0 0.0
        %684 = vmatprep.subr.mxu0 0.0
        %685 = vmatpush2.msra.mxu0 0.0
        %686 = vmatprep.subr.mxu0 0.0
        %687 = vmatpush2.msra.mxu0 0.0
        %688 = vmatprep.subr.mxu0 0.0
        %689 = vmatpush2.msra.mxu0 0.0
        %690 = vmatprep.subr.mxu0 0.0
        %691 = vmatpush2.msra.mxu0 0.0
        %692 = vmatprep.mubr.f32.mxu0 0.0
        %693 = vmatmul.mubr.f32.gmra.mxu0 %v627
        %v694 = vpop.f32.mrf.mxu0
        %v695 = vadd.f32 0.0, %v694
        %v696 = vpop.f32.mrf.mxu0
        %697 = vdwg.mxu0
        %v698 = vmax.f32 %v626, %v695
        %v699 = vld [vmem:[#allocation2 + $0x10] sm:$0xff]
        %700 = vmatprep.subr.mxu0 0.0
        %701 = vmatpush1.msra.mxu0 %v244
        %702 = vmatprep.subr.mxu0 0.0
        %703 = vmatpush1.msra.mxu0 %v243
        %704 = vmatprep.subr.mxu0 0.0
        %705 = vmatpush1.msra.mxu0 %v242
        %706 = vmatprep.subr.mxu0 0.0
        %707 = vmatpush1.msra.mxu0 %v241
        %708 = vmatprep.subr.mxu0 0.0
        %709 = vmatpush1.msra.mxu0 %v240
        %710 = vmatprep.subr.mxu0 0.0
        %711 = vmatpush1.msra.mxu0 %v239
        %712 = vmatprep.subr.mxu0 0.0
        %713 = vmatpush1.msra.mxu0 %v238
        %714 = vmatprep.subr.mxu0 0.0
        %715 = vmatpush1.msra.mxu0 %v237
        %716 = vmatprep.subr.mxu0 0.0
        %717 = vmatpush1.msra.mxu0 %v236
        %718 = vmatprep.subr.mxu0 0.0
        %719 = vmatpush1.msra.mxu0 %v235
        %720 = vmatprep.subr.mxu0 0.0
        %721 = vmatpush1.msra.mxu0 %v234
        %722 = vmatprep.subr.mxu0 0.0
        %723 = vmatpush1.msra.mxu0 %v233
        %724 = vmatprep.subr.mxu0 0.0
        %725 = vmatpush1.msra.mxu0 %v232
        %726 = vmatprep.subr.mxu0 0.0
        %727 = vmatpush1.msra.mxu0 %v231
        %728 = vmatprep.subr.mxu0 0.0
        %729 = vmatpush1.msra.mxu0 %v230
        %730 = vmatprep.subr.mxu0 0.0
        %731 = vmatpush1.msra.mxu0 %v229
        %732 = vmatprep.subr.mxu0 0.0
        %733 = vmatpush2.msra.mxu0 0.0
        %734 = vmatprep.subr.mxu0 0.0
        %735 = vmatpush2.msra.mxu0 0.0
        %736 = vmatprep.subr.mxu0 0.0
        %737 = vmatpush2.msra.mxu0 0.0
        %738 = vmatprep.subr.mxu0 0.0
        %739 = vmatpush2.msra.mxu0 0.0
        %740 = vmatprep.subr.mxu0 0.0
        %741 = vmatpush2.msra.mxu0 0.0
        %742 = vmatprep.subr.mxu0 0.0
        %743 = vmatpush2.msra.mxu0 0.0
        %744 = vmatprep.subr.mxu0 0.0
        %745 = vmatpush2.msra.mxu0 0.0
        %746 = vmatprep.subr.mxu0 0.0
        %747 = vmatpush2.msra.mxu0 0.0
        %748 = vmatprep.subr.mxu0 0.0
        %749 = vmatpush2.msra.mxu0 0.0
        %750 = vmatprep.subr.mxu0 0.0
        %751 = vmatpush2.msra.mxu0 0.0
        %752 = vmatprep.subr.mxu0 0.0
        %753 = vmatpush2.msra.mxu0 0.0
        %754 = vmatprep.subr.mxu0 0.0
        %755 = vmatpush2.msra.mxu0 0.0
        %756 = vmatprep.subr.mxu0 0.0
        %757 = vmatpush2.msra.mxu0 0.0
        %758 = vmatprep.subr.mxu0 0.0
        %759 = vmatpush2.msra.mxu0 0.0
        %760 = vmatprep.subr.mxu0 0.0
        %761 = vmatpush2.msra.mxu0 0.0
        %762 = vmatprep.subr.mxu0 0.0
        %763 = vmatpush2.msra.mxu0 0.0
        %764 = vmatprep.mubr.f32.mxu0 0.0
        %765 = vmatmul.mubr.f32.gmra.mxu0 %v699
        %v766 = vpop.f32.mrf.mxu0
        %v767 = vadd.f32 0.0, %v766
        %v768 = vpop.f32.mrf.mxu0
        %769 = vdwg.mxu0
        %v770 = vmax.f32 %v698, %v767
        %v771 = vld [vmem:[#allocation2 + $0x18] sm:$0xff]
        %v772 = vld [vmem:[%s3] sm:$0x1]
        %v773 = vlaneseq
        %v774 = vshrl.u32 %v773, 7
        %v775 = vsub.s32 0, %v774
        %v776 = vrot.slane %v772, %v775
        %777 = vmatprep.subr.mxu0 0.0
        %778 = vmatpush1.msra.mxu0 %v244
        %779 = vmatprep.subr.mxu0 0.0
        %780 = vmatpush1.msra.mxu0 %v243
        %781 = vmatprep.subr.mxu0 0.0
        %782 = vmatpush1.msra.mxu0 %v242
        %783 = vmatprep.subr.mxu0 0.0
        %784 = vmatpush1.msra.mxu0 %v241
        %785 = vmatprep.subr.mxu0 0.0
        %786 = vmatpush1.msra.mxu0 %v240
        %787 = vmatprep.subr.mxu0 0.0
        %788 = vmatpush1.msra.mxu0 %v239
        %789 = vmatprep.subr.mxu0 0.0
        %790 = vmatpush1.msra.mxu0 %v238
        %791 = vmatprep.subr.mxu0 0.0
        %792 = vmatpush1.msra.mxu0 %v237
        %793 = vmatprep.subr.mxu0 0.0
        %794 = vmatpush1.msra.mxu0 %v236
        %795 = vmatprep.subr.mxu0 0.0
        %796 = vmatpush1.msra.mxu0 %v235
        %797 = vmatprep.subr.mxu0 0.0
        %798 = vmatpush1.msra.mxu0 %v234
        %799 = vmatprep.subr.mxu0 0.0
        %800 = vmatpush1.msra.mxu0 %v233
        %801 = vmatprep.subr.mxu0 0.0
        %802 = vmatpush1.msra.mxu0 %v232
        %803 = vmatprep.subr.mxu0 0.0
        %804 = vmatpush1.msra.mxu0 %v231
        %805 = vmatprep.subr.mxu0 0.0
        %806 = vmatpush1.msra.mxu0 %v230
        %807 = vmatprep.subr.mxu0 0.0
        %808 = vmatpush1.msra.mxu0 %v229
        %809 = vmatprep.subr.mxu0 0.0
        %810 = vmatpush2.msra.mxu0 0.0
        %811 = vmatprep.subr.mxu0 0.0
        %812 = vmatpush2.msra.mxu0 0.0
        %813 = vmatprep.subr.mxu0 0.0
        %814 = vmatpush2.msra.mxu0 0.0
        %815 = vmatprep.subr.mxu0 0.0
        %816 = vmatpush2.msra.mxu0 0.0
        %817 = vmatprep.subr.mxu0 0.0
        %818 = vmatpush2.msra.mxu0 0.0
        %819 = vmatprep.subr.mxu0 0.0
        %820 = vmatpush2.msra.mxu0 0.0
        %821 = vmatprep.subr.mxu0 0.0
        %822 = vmatpush2.msra.mxu0 0.0
        %823 = vmatprep.subr.mxu0 0.0
        %824 = vmatpush2.msra.mxu0 0.0
        %825 = vmatprep.subr.mxu0 0.0
        %826 = vmatpush2.msra.mxu0 0.0
        %827 = vmatprep.subr.mxu0 0.0
        %828 = vmatpush2.msra.mxu0 0.0
        %829 = vmatprep.subr.mxu0 0.0
        %830 = vmatpush2.msra.mxu0 0.0
        %831 = vmatprep.subr.mxu0 0.0
        %832 = vmatpush2.msra.mxu0 0.0
        %833 = vmatprep.subr.mxu0 0.0
        %834 = vmatpush2.msra.mxu0 0.0
        %835 = vmatprep.subr.mxu0 0.0
        %836 = vmatpush2.msra.mxu0 0.0
        %837 = vmatprep.subr.mxu0 0.0
        %838 = vmatpush2.msra.mxu0 0.0
        %839 = vmatprep.subr.mxu0 0.0
        %840 = vmatpush2.msra.mxu0 0.0
        %841 = vmatprep.mubr.f32.mxu0 0.0
        %842 = vmatmul.mubr.f32.gmra.mxu0 %v771
        %v843 = vpop.f32.mrf.mxu0
        %v844 = vadd.f32 %v776, %v843
        %v845 = vpop.f32.mrf.mxu0
        %846 = vdwg.mxu0
        %v847 = vmax.f32 %v770, %v844
        %v848 = vld [vmem:[%s200] sm:$0xff]
        %v849 = vld [vmem:[%s200 + $0x8] sm:$0xff]
        %v850 = vld [vmem:[%s200 + $0x10] sm:$0xff]
        %v851 = vld [vmem:[%s200 + $0x18] sm:$0xff]
        %852 = vrot.lane.b32.xlu0 %v848, 64
        %v853 = vpop.permute.xlu0 %852
        %854 = vrot.lane.b32.xlu0 %v849, 64
        %v855 = vpop.permute.xlu0 %854
        %856 = vrot.lane.b32.xlu0 %v850, 64
        %v857 = vpop.permute.xlu0 %856
        %858 = vrot.lane.b32.xlu0 %v851, 64
        %v859 = vpop.permute.xlu0 %858
        %vm860 = vcmp.lt.s32.totalorder %v545, 64
        %v861 = vsel %vm860, %v857, %v859
        %v862 = vsel %vm860, %v855, %v857
        %v863 = vsel %vm860, %v853, %v855
        %v864 = vsel %vm860, %v859, %v853
        %865 = vst [vmem:[#allocation2] sm:$0xff] %v863
        %866 = vst [vmem:[#allocation2 + $0x8] sm:$0xff] %v862
        %867 = vst [vmem:[#allocation2 + $0x10] sm:$0xff] %v861
        %868 = vst [vmem:[#allocation2 + $0x18] sm:$0xff] %v864
        %v869 = vld [vmem:[#allocation2] sm:$0xff]
        %870 = vmatprep.subr.mxu0 0.0
        %871 = vmatpush1.msra.mxu0 %v244
        %872 = vmatprep.subr.mxu0 0.0
        %873 = vmatpush1.msra.mxu0 %v243
        %874 = vmatprep.subr.mxu0 0.0
        %875 = vmatpush1.msra.mxu0 %v242
        %876 = vmatprep.subr.mxu0 0.0
        %877 = vmatpush1.msra.mxu0 %v241
        %878 = vmatprep.subr.mxu0 0.0
        %879 = vmatpush1.msra.mxu0 %v240
        %880 = vmatprep.subr.mxu0 0.0
        %881 = vmatpush1.msra.mxu0 %v239
        %882 = vmatprep.subr.mxu0 0.0
        %883 = vmatpush1.msra.mxu0 %v238
        %884 = vmatprep.subr.mxu0 0.0
        %885 = vmatpush1.msra.mxu0 %v237
        %886 = vmatprep.subr.mxu0 0.0
        %887 = vmatpush1.msra.mxu0 %v236
        %888 = vmatprep.subr.mxu0 0.0
        %889 = vmatpush1.msra.mxu0 %v235
        %890 = vmatprep.subr.mxu0 0.0
        %891 = vmatpush1.msra.mxu0 %v234
        %892 = vmatprep.subr.mxu0 0.0
        %893 = vmatpush1.msra.mxu0 %v233
        %894 = vmatprep.subr.mxu0 0.0
        %895 = vmatpush1.msra.mxu0 %v232
        %896 = vmatprep.subr.mxu0 0.0
        %897 = vmatpush1.msra.mxu0 %v231
        %898 = vmatprep.subr.mxu0 0.0
        %899 = vmatpush1.msra.mxu0 %v230
        %900 = vmatprep.subr.mxu0 0.0
        %901 = vmatpush1.msra.mxu0 %v229
        %902 = vmatprep.subr.mxu0 0.0
        %903 = vmatpush2.msra.mxu0 0.0
        %904 = vmatprep.subr.mxu0 0.0
        %905 = vmatpush2.msra.mxu0 0.0
        %906 = vmatprep.subr.mxu0 0.0
        %907 = vmatpush2.msra.mxu0 0.0
        %908 = vmatprep.subr.mxu0 0.0
        %909 = vmatpush2.msra.mxu0 0.0
        %910 = vmatprep.subr.mxu0 0.0
        %911 = vmatpush2.msra.mxu0 0.0
        %912 = vmatprep.subr.mxu0 0.0
        %913 = vmatpush2.msra.mxu0 0.0
        %914 = vmatprep.subr.mxu0 0.0
        %915 = vmatpush2.msra.mxu0 0.0
        %916 = vmatprep.subr.mxu0 0.0
        %917 = vmatpush2.msra.mxu0 0.0
        %918 = vmatprep.subr.mxu0 0.0
        %919 = vmatpush2.msra.mxu0 0.0
        %920 = vmatprep.subr.mxu0 0.0
        %921 = vmatpush2.msra.mxu0 0.0
        %922 = vmatprep.subr.mxu0 0.0
        %923 = vmatpush2.msra.mxu0 0.0
        %924 = vmatprep.subr.mxu0 0.0
        %925 = vmatpush2.msra.mxu0 0.0
        %926 = vmatprep.subr.mxu0 0.0
        %927 = vmatpush2.msra.mxu0 0.0
        %928 = vmatprep.subr.mxu0 0.0
        %929 = vmatpush2.msra.mxu0 0.0
        %930 = vmatprep.subr.mxu0 0.0
        %931 = vmatpush2.msra.mxu0 0.0
        %932 = vmatprep.subr.mxu0 0.0
        %933 = vmatpush2.msra.mxu0 0.0
        %934 = vmatprep.mubr.f32.mxu0 0.0
        %935 = vmatmul.mubr.f32.gmra.mxu0 %v869
        %v936 = vpop.f32.mrf.mxu0
        %v937 = vadd.f32 0.0, %v936
        %v938 = vpop.f32.mrf.mxu0
        %939 = vdwg.mxu0
        %v940 = vmax.f32 %v847, %v937
        %v941 = vld [vmem:[#allocation2 + $0x8] sm:$0xff]
        %942 = vmatprep.subr.mxu0 0.0
        %943 = vmatpush1.msra.mxu0 %v244
        %944 = vmatprep.subr.mxu0 0.0
        %945 = vmatpush1.msra.mxu0 %v243
        %946 = vmatprep.subr.mxu0 0.0
        %947 = vmatpush1.msra.mxu0 %v242
        %948 = vmatprep.subr.mxu0 0.0
        %949 = vmatpush1.msra.mxu0 %v241
        %950 = vmatprep.subr.mxu0 0.0
        %951 = vmatpush1.msra.mxu0 %v240
        %952 = vmatprep.subr.mxu0 0.0
        %953 = vmatpush1.msra.mxu0 %v239
        %954 = vmatprep.subr.mxu0 0.0
        %955 = vmatpush1.msra.mxu0 %v238
        %956 = vmatprep.subr.mxu0 0.0
        %957 = vmatpush1.msra.mxu0 %v237
        %958 = vmatprep.subr.mxu0 0.0
        %959 = vmatpush1.msra.mxu0 %v236
        %960 = vmatprep.subr.mxu0 0.0
        %961 = vmatpush1.msra.mxu0 %v235
        %962 = vmatprep.subr.mxu0 0.0
        %963 = vmatpush1.msra.mxu0 %v234
        %964 = vmatprep.subr.mxu0 0.0
        %965 = vmatpush1.msra.mxu0 %v233
        %966 = vmatprep.subr.mxu0 0.0
        %967 = vmatpush1.msra.mxu0 %v232
        %968 = vmatprep.subr.mxu0 0.0
        %969 = vmatpush1.msra.mxu0 %v231
        %970 = vmatprep.subr.mxu0 0.0
        %971 = vmatpush1.msra.mxu0 %v230
        %972 = vmatprep.subr.mxu0 0.0
        %973 = vmatpush1.msra.mxu0 %v229
        %974 = vmatprep.subr.mxu0 0.0
        %975 = vmatpush2.msra.mxu0 0.0
        %976 = vmatprep.subr.mxu0 0.0
        %977 = vmatpush2.msra.mxu0 0.0
        %978 = vmatprep.subr.mxu0 0.0
        %979 = vmatpush2.msra.mxu0 0.0
        %980 = vmatprep.subr.mxu0 0.0
        %981 = vmatpush2.msra.mxu0 0.0
        %982 = vmatprep.subr.mxu0 0.0
        %983 = vmatpush2.msra.mxu0 0.0
        %984 = vmatprep.subr.mxu0 0.0
        %985 = vmatpush2.msra.mxu0 0.0
        %986 = vmatprep.subr.mxu0 0.0
        %987 = vmatpush2.msra.mxu0 0.0
        %988 = vmatprep.subr.mxu0 0.0
        %989 = vmatpush2.msra.mxu0 0.0
        %990 = vmatprep.subr.mxu0 0.0
        %991 = vmatpush2.msra.mxu0 0.0
        %992 = vmatprep.subr.mxu0 0.0
        %993 = vmatpush2.msra.mxu0 0.0
        %994 = vmatprep.subr.mxu0 0.0
        %995 = vmatpush2.msra.mxu0 0.0
        %996 = vmatprep.subr.mxu0 0.0
        %997 = vmatpush2.msra.mxu0 0.0
        %998 = vmatprep.subr.mxu0 0.0
        %999 = vmatpush2.msra.mxu0 0.0
        %1000 = vmatprep.subr.mxu0 0.0
        %1001 = vmatpush2.msra.mxu0 0.0
        %1002 = vmatprep.subr.mxu0 0.0
        %1003 = vmatpush2.msra.mxu0 0.0
        %1004 = vmatprep.subr.mxu0 0.0
        %1005 = vmatpush2.msra.mxu0 0.0
        %1006 = vmatprep.mubr.f32.mxu0 0.0
        %1007 = vmatmul.mubr.f32.gmra.mxu0 %v941
        %v1008 = vpop.f32.mrf.mxu0
        %v1009 = vadd.f32 0.0, %v1008
        %v1010 = vpop.f32.mrf.mxu0
        %1011 = vdwg.mxu0
        %v1012 = vmax.f32 %v940, %v1009
        %v1013 = vld [vmem:[#allocation2 + $0x10] sm:$0xff]
        %1014 = vmatprep.subr.mxu0 0.0
        %1015 = vmatpush1.msra.mxu0 %v244
        %1016 = vmatprep.subr.mxu0 0.0
        %1017 = vmatpush1.msra.mxu0 %v243
        %1018 = vmatprep.subr.mxu0 0.0
        %1019 = vmatpush1.msra.mxu0 %v242
        %1020 = vmatprep.subr.mxu0 0.0
        %1021 = vmatpush1.msra.mxu0 %v241
        %1022 = vmatprep.subr.mxu0 0.0
        %1023 = vmatpush1.msra.mxu0 %v240
        %1024 = vmatprep.subr.mxu0 0.0
        %1025 = vmatpush1.msra.mxu0 %v239
        %1026 = vmatprep.subr.mxu0 0.0
        %1027 = vmatpush1.msra.mxu0 %v238
        %1028 = vmatprep.subr.mxu0 0.0
        %1029 = vmatpush1.msra.mxu0 %v237
        %1030 = vmatprep.subr.mxu0 0.0
        %1031 = vmatpush1.msra.mxu0 %v236
        %1032 = vmatprep.subr.mxu0 0.0
        %1033 = vmatpush1.msra.mxu0 %v235
        %1034 = vmatprep.subr.mxu0 0.0
        %1035 = vmatpush1.msra.mxu0 %v234
        %1036 = vmatprep.subr.mxu0 0.0
        %1037 = vmatpush1.msra.mxu0 %v233
        %1038 = vmatprep.subr.mxu0 0.0
        %1039 = vmatpush1.msra.mxu0 %v232
        %1040 = vmatprep.subr.mxu0 0.0
        %1041 = vmatpush1.msra.mxu0 %v231
        %1042 = vmatprep.subr.mxu0 0.0
        %1043 = vmatpush1.msra.mxu0 %v230
        %1044 = vmatprep.subr.mxu0 0.0
        %1045 = vmatpush1.msra.mxu0 %v229
        %1046 = vmatprep.subr.mxu0 0.0
        %1047 = vmatpush2.msra.mxu0 0.0
        %1048 = vmatprep.subr.mxu0 0.0
        %1049 = vmatpush2.msra.mxu0 0.0
        %1050 = vmatprep.subr.mxu0 0.0
        %1051 = vmatpush2.msra.mxu0 0.0
        %1052 = vmatprep.subr.mxu0 0.0
        %1053 = vmatpush2.msra.mxu0 0.0
        %1054 = vmatprep.subr.mxu0 0.0
        %1055 = vmatpush2.msra.mxu0 0.0
        %1056 = vmatprep.subr.mxu0 0.0
        %1057 = vmatpush2.msra.mxu0 0.0
        %1058 = vmatprep.subr.mxu0 0.0
        %1059 = vmatpush2.msra.mxu0 0.0
        %1060 = vmatprep.subr.mxu0 0.0
        %1061 = vmatpush2.msra.mxu0 0.0
        %1062 = vmatprep.subr.mxu0 0.0
        %1063 = vmatpush2.msra.mxu0 0.0
        %1064 = vmatprep.subr.mxu0 0.0
        %1065 = vmatpush2.msra.mxu0 0.0
        %1066 = vmatprep.subr.mxu0 0.0
        %1067 = vmatpush2.msra.mxu0 0.0
        %1068 = vmatprep.subr.mxu0 0.0
        %1069 = vmatpush2.msra.mxu0 0.0
        %1070 = vmatprep.subr.mxu0 0.0
        %1071 = vmatpush2.msra.mxu0 0.0
        %1072 = vmatprep.subr.mxu0 0.0
        %1073 = vmatpush2.msra.mxu0 0.0
        %1074 = vmatprep.subr.mxu0 0.0
        %1075 = vmatpush2.msra.mxu0 0.0
        %1076 = vmatprep.subr.mxu0 0.0
        %1077 = vmatpush2.msra.mxu0 0.0
        %1078 = vmatprep.mubr.f32.mxu0 0.0
        %1079 = vmatmul.mubr.f32.gmra.mxu0 %v1013
        %v1080 = vpop.f32.mrf.mxu0
        %v1081 = vadd.f32 0.0, %v1080
        %v1082 = vpop.f32.mrf.mxu0
        %1083 = vdwg.mxu0
        %v1084 = vmax.f32 %v1012, %v1081
        %v1085 = vld [vmem:[#allocation2 + $0x18] sm:$0xff]
        %v1086 = vld [vmem:[%s3 + $0x1] sm:$0x1]
        %v1087 = vlaneseq
        %v1088 = vshrl.u32 %v1087, 7
        %v1089 = vsub.s32 0, %v1088
        %v1090 = vrot.slane %v1086, %v1089
        %1091 = vmatprep.subr.mxu0 0.0
        %1092 = vmatpush1.msra.mxu0 %v244
        %1093 = vmatprep.subr.mxu0 0.0
        %1094 = vmatpush1.msra.mxu0 %v243
        %1095 = vmatprep.subr.mxu0 0.0
        %1096 = vmatpush1.msra.mxu0 %v242
        %1097 = vmatprep.subr.mxu0 0.0
        %1098 = vmatpush1.msra.mxu0 %v241
        %1099 = vmatprep.subr.mxu0 0.0
        %1100 = vmatpush1.msra.mxu0 %v240
        %1101 = vmatprep.subr.mxu0 0.0
        %1102 = vmatpush1.msra.mxu0 %v239
        %1103 = vmatprep.subr.mxu0 0.0
        %1104 = vmatpush1.msra.mxu0 %v238
        %1105 = vmatprep.subr.mxu0 0.0
        %1106 = vmatpush1.msra.mxu0 %v237
        %1107 = vmatprep.subr.mxu0 0.0
        %1108 = vmatpush1.msra.mxu0 %v236
        %1109 = vmatprep.subr.mxu0 0.0
        %1110 = vmatpush1.msra.mxu0 %v235
        %1111 = vmatprep.subr.mxu0 0.0
        %1112 = vmatpush1.msra.mxu0 %v234
        %1113 = vmatprep.subr.mxu0 0.0
        %1114 = vmatpush1.msra.mxu0 %v233
        %1115 = vmatprep.subr.mxu0 0.0
        %1116 = vmatpush1.msra.mxu0 %v232
        %1117 = vmatprep.subr.mxu0 0.0
        %1118 = vmatpush1.msra.mxu0 %v231
        %1119 = vmatprep.subr.mxu0 0.0
        %1120 = vmatpush1.msra.mxu0 %v230
        %1121 = vmatprep.subr.mxu0 0.0
        %1122 = vmatpush1.msra.mxu0 %v229
        %1123 = vmatprep.subr.mxu0 0.0
        %1124 = vmatpush2.msra.mxu0 0.0
        %1125 = vmatprep.subr.mxu0 0.0
        %1126 = vmatpush2.msra.mxu0 0.0
        %1127 = vmatprep.subr.mxu0 0.0
        %1128 = vmatpush2.msra.mxu0 0.0
        %1129 = vmatprep.subr.mxu0 0.0
        %1130 = vmatpush2.msra.mxu0 0.0
        %1131 = vmatprep.subr.mxu0 0.0
        %1132 = vmatpush2.msra.mxu0 0.0
        %1133 = vmatprep.subr.mxu0 0.0
        %1134 = vmatpush2.msra.mxu0 0.0
        %1135 = vmatprep.subr.mxu0 0.0
        %1136 = vmatpush2.msra.mxu0 0.0
        %1137 = vmatprep.subr.mxu0 0.0
        %1138 = vmatpush2.msra.mxu0 0.0
        %1139 = vmatprep.subr.mxu0 0.0
        %1140 = vmatpush2.msra.mxu0 0.0
        %1141 = vmatprep.subr.mxu0 0.0
        %1142 = vmatpush2.msra.mxu0 0.0
        %1143 = vmatprep.subr.mxu0 0.0
        %1144 = vmatpush2.msra.mxu0 0.0
        %1145 = vmatprep.subr.mxu0 0.0
        %1146 = vmatpush2.msra.mxu0 0.0
        %1147 = vmatprep.subr.mxu0 0.0
        %1148 = vmatpush2.msra.mxu0 0.0
        %1149 = vmatprep.subr.mxu0 0.0
        %1150 = vmatpush2.msra.mxu0 0.0
        %1151 = vmatprep.subr.mxu0 0.0
        %1152 = vmatpush2.msra.mxu0 0.0
        %1153 = vmatprep.subr.mxu0 0.0
        %1154 = vmatpush2.msra.mxu0 0.0
        %1155 = vmatprep.mubr.f32.mxu0 0.0
        %1156 = vmatmul.mubr.f32.gmra.mxu0 %v1085
        %v1157 = vpop.f32.mrf.mxu0
        %v1158 = vadd.f32 %v1090, %v1157
        %v1159 = vpop.f32.mrf.mxu0
        %1160 = vdwg.mxu0
        %v1161 = vmax.f32 %v1084, %v1158
        %v1162 = vld [vmem:[%s200] sm:$0xff]
        %v1163 = vld [vmem:[%s200 + $0x8] sm:$0xff]
        %v1164 = vld [vmem:[%s200 + $0x10] sm:$0xff]
        %v1165 = vld [vmem:[%s200 + $0x18] sm:$0xff]
        %1166 = vrot.lane.b32.xlu0 %v1162, 32
        %v1167 = vpop.permute.xlu0 %1166
        %1168 = vrot.lane.b32.xlu0 %v1163, 32
        %v1169 = vpop.permute.xlu0 %1168
        %1170 = vrot.lane.b32.xlu0 %v1164, 32
        %v1171 = vpop.permute.xlu0 %1170
        %1172 = vrot.lane.b32.xlu0 %v1165, 32
        %v1173 = vpop.permute.xlu0 %1172
        %vm1174 = vcmp.lt.s32.totalorder %v545, 32
        %v1175 = vsel %vm1174, %v1171, %v1173
        %v1176 = vsel %vm1174, %v1169, %v1171
        %v1177 = vsel %vm1174, %v1167, %v1169
        %v1178 = vsel %vm1174, %v1173, %v1167
        %1179 = vst [vmem:[#allocation2] sm:$0xff] %v1177
        %1180 = vst [vmem:[#allocation2 + $0x8] sm:$0xff] %v1176
        %1181 = vst [vmem:[#allocation2 + $0x10] sm:$0xff] %v1175
        %1182 = vst [vmem:[#allocation2 + $0x18] sm:$0xff] %v1178
        %v1183 = vld [vmem:[#allocation2] sm:$0xff]
        %1184 = vmatprep.subr.mxu0 0.0
        %1185 = vmatpush1.msra.mxu0 %v244
        %1186 = vmatprep.subr.mxu0 0.0
        %1187 = vmatpush1.msra.mxu0 %v243
        %1188 = vmatprep.subr.mxu0 0.0
        %1189 = vmatpush1.msra.mxu0 %v242
        %1190 = vmatprep.subr.mxu0 0.0
        %1191 = vmatpush1.msra.mxu0 %v241
        %1192 = vmatprep.subr.mxu0 0.0
        %1193 = vmatpush1.msra.mxu0 %v240
        %1194 = vmatprep.subr.mxu0 0.0
        %1195 = vmatpush1.msra.mxu0 %v239
        %1196 = vmatprep.subr.mxu0 0.0
        %1197 = vmatpush1.msra.mxu0 %v238
        %1198 = vmatprep.subr.mxu0 0.0
        %1199 = vmatpush1.msra.mxu0 %v237
        %1200 = vmatprep.subr.mxu0 0.0
        %1201 = vmatpush1.msra.mxu0 %v236
        %1202 = vmatprep.subr.mxu0 0.0
        %1203 = vmatpush1.msra.mxu0 %v235
        %1204 = vmatprep.subr.mxu0 0.0
        %1205 = vmatpush1.msra.mxu0 %v234
        %1206 = vmatprep.subr.mxu0 0.0
        %1207 = vmatpush1.msra.mxu0 %v233
        %1208 = vmatprep.subr.mxu0 0.0
        %1209 = vmatpush1.msra.mxu0 %v232
        %1210 = vmatprep.subr.mxu0 0.0
        %1211 = vmatpush1.msra.mxu0 %v231
        %1212 = vmatprep.subr.mxu0 0.0
        %1213 = vmatpush1.msra.mxu0 %v230
        %1214 = vmatprep.subr.mxu0 0.0
        %1215 = vmatpush1.msra.mxu0 %v229
        %1216 = vmatprep.subr.mxu0 0.0
        %1217 = vmatpush2.msra.mxu0 0.0
        %1218 = vmatprep.subr.mxu0 0.0
        %1219 = vmatpush2.msra.mxu0 0.0
        %1220 = vmatprep.subr.mxu0 0.0
        %1221 = vmatpush2.msra.mxu0 0.0
        %1222 = vmatprep.subr.mxu0 0.0
        %1223 = vmatpush2.msra.mxu0 0.0
        %1224 = vmatprep.subr.mxu0 0.0
        %1225 = vmatpush2.msra.mxu0 0.0
        %1226 = vmatprep.subr.mxu0 0.0
        %1227 = vmatpush2.msra.mxu0 0.0
        %1228 = vmatprep.subr.mxu0 0.0
        %1229 = vmatpush2.msra.mxu0 0.0
        %1230 = vmatprep.subr.mxu0 0.0
        %1231 = vmatpush2.msra.mxu0 0.0
        %1232 = vmatprep.subr.mxu0 0.0
        %1233 = vmatpush2.msra.mxu0 0.0
        %1234 = vmatprep.subr.mxu0 0.0
        %1235 = vmatpush2.msra.mxu0 0.0
        %1236 = vmatprep.subr.mxu0 0.0
        %1237 = vmatpush2.msra.mxu0 0.0
        %1238 = vmatprep.subr.mxu0 0.0
        %1239 = vmatpush2.msra.mxu0 0.0
        %1240 = vmatprep.subr.mxu0 0.0
        %1241 = vmatpush2.msra.mxu0 0.0
        %1242 = vmatprep.subr.mxu0 0.0
        %1243 = vmatpush2.msra.mxu0 0.0
        %1244 = vmatprep.subr.mxu0 0.0
        %1245 = vmatpush2.msra.mxu0 0.0
        %1246 = vmatprep.subr.mxu0 0.0
        %1247 = vmatpush2.msra.mxu0 0.0
        %1248 = vmatprep.mubr.f32.mxu0 0.0
        %1249 = vmatmul.mubr.f32.gmra.mxu0 %v1183
        %v1250 = vpop.f32.mrf.mxu0
        %v1251 = vadd.f32 0.0, %v1250
        %v1252 = vpop.f32.mrf.mxu0
        %1253 = vdwg.mxu0
        %v1254 = vmax.f32 %v1161, %v1251
        %v1255 = vld [vmem:[#allocation2 + $0x8] sm:$0xff]
        %1256 = vmatprep.subr.mxu0 0.0
        %1257 = vmatpush1.msra.mxu0 %v244
        %1258 = vmatprep.subr.mxu0 0.0
        %1259 = vmatpush1.msra.mxu0 %v243
        %1260 = vmatprep.subr.mxu0 0.0
        %1261 = vmatpush1.msra.mxu0 %v242
        %1262 = vmatprep.subr.mxu0 0.0
        %1263 = vmatpush1.msra.mxu0 %v241
        %1264 = vmatprep.subr.mxu0 0.0
        %1265 = vmatpush1.msra.mxu0 %v240
        %1266 = vmatprep.subr.mxu0 0.0
        %1267 = vmatpush1.msra.mxu0 %v239
        %1268 = vmatprep.subr.mxu0 0.0
        %1269 = vmatpush1.msra.mxu0 %v238
        %1270 = vmatprep.subr.mxu0 0.0
        %1271 = vmatpush1.msra.mxu0 %v237
        %1272 = vmatprep.subr.mxu0 0.0
        %1273 = vmatpush1.msra.mxu0 %v236
        %1274 = vmatprep.subr.mxu0 0.0
        %1275 = vmatpush1.msra.mxu0 %v235
        %1276 = vmatprep.subr.mxu0 0.0
        %1277 = vmatpush1.msra.mxu0 %v234
        %1278 = vmatprep.subr.mxu0 0.0
        %1279 = vmatpush1.msra.mxu0 %v233
        %1280 = vmatprep.subr.mxu0 0.0
        %1281 = vmatpush1.msra.mxu0 %v232
        %1282 = vmatprep.subr.mxu0 0.0
        %1283 = vmatpush1.msra.mxu0 %v231
        %1284 = vmatprep.subr.mxu0 0.0
        %1285 = vmatpush1.msra.mxu0 %v230
        %1286 = vmatprep.subr.mxu0 0.0
        %1287 = vmatpush1.msra.mxu0 %v229
        %1288 = vmatprep.subr.mxu0 0.0
        %1289 = vmatpush2.msra.mxu0 0.0
        %1290 = vmatprep.subr.mxu0 0.0
        %1291 = vmatpush2.msra.mxu0 0.0
        %1292 = vmatprep.subr.mxu0 0.0
        %1293 = vmatpush2.msra.mxu0 0.0
        %1294 = vmatprep.subr.mxu0 0.0
        %1295 = vmatpush2.msra.mxu0 0.0
        %1296 = vmatprep.subr.mxu0 0.0
        %1297 = vmatpush2.msra.mxu0 0.0
        %1298 = vmatprep.subr.mxu0 0.0
        %1299 = vmatpush2.msra.mxu0 0.0
        %1300 = vmatprep.subr.mxu0 0.0
        %1301 = vmatpush2.msra.mxu0 0.0
        %1302 = vmatprep.subr.mxu0 0.0
        %1303 = vmatpush2.msra.mxu0 0.0
        %1304 = vmatprep.subr.mxu0 0.0
        %1305 = vmatpush2.msra.mxu0 0.0
        %1306 = vmatprep.subr.mxu0 0.0
        %1307 = vmatpush2.msra.mxu0 0.0
        %1308 = vmatprep.subr.mxu0 0.0
        %1309 = vmatpush2.msra.mxu0 0.0
        %1310 = vmatprep.subr.mxu0 0.0
        %1311 = vmatpush2.msra.mxu0 0.0
        %1312 = vmatprep.subr.mxu0 0.0
        %1313 = vmatpush2.msra.mxu0 0.0
        %1314 = vmatprep.subr.mxu0 0.0
        %1315 = vmatpush2.msra.mxu0 0.0
        %1316 = vmatprep.subr.mxu0 0.0
        %1317 = vmatpush2.msra.mxu0 0.0
        %1318 = vmatprep.subr.mxu0 0.0
        %1319 = vmatpush2.msra.mxu0 0.0
        %1320 = vmatprep.mubr.f32.mxu0 0.0
        %1321 = vmatmul.mubr.f32.gmra.mxu0 %v1255
        %v1322 = vpop.f32.mrf.mxu0
        %v1323 = vadd.f32 0.0, %v1322
        %v1324 = vpop.f32.mrf.mxu0
        %1325 = vdwg.mxu0
        %v1326 = vmax.f32 %v1254, %v1323
        %v1327 = vld [vmem:[#allocation2 + $0x10] sm:$0xff]
        %1328 = vmatprep.subr.mxu0 0.0
        %1329 = vmatpush1.msra.mxu0 %v244
        %1330 = vmatprep.subr.mxu0 0.0
        %1331 = vmatpush1.msra.mxu0 %v243
        %1332 = vmatprep.subr.mxu0 0.0
        %1333 = vmatpush1.msra.mxu0 %v242
        %1334 = vmatprep.subr.mxu0 0.0
        %1335 = vmatpush1.msra.mxu0 %v241
        %1336 = vmatprep.subr.mxu0 0.0
        %1337 = vmatpush1.msra.mxu0 %v240
        %1338 = vmatprep.subr.mxu0 0.0
        %1339 = vmatpush1.msra.mxu0 %v239
        %1340 = vmatprep.subr.mxu0 0.0
        %1341 = vmatpush1.msra.mxu0 %v238
        %1342 = vmatprep.subr.mxu0 0.0
        %1343 = vmatpush1.msra.mxu0 %v237
        %1344 = vmatprep.subr.mxu0 0.0
        %1345 = vmatpush1.msra.mxu0 %v236
        %1346 = vmatprep.subr.mxu0 0.0
        %1347 = vmatpush1.msra.mxu0 %v235
        %1348 = vmatprep.subr.mxu0 0.0
        %1349 = vmatpush1.msra.mxu0 %v234
        %1350 = vmatprep.subr.mxu0 0.0
        %1351 = vmatpush1.msra.mxu0 %v233
        %1352 = vmatprep.subr.mxu0 0.0
        %1353 = vmatpush1.msra.mxu0 %v232
        %1354 = vmatprep.subr.mxu0 0.0
        %1355 = vmatpush1.msra.mxu0 %v231
        %1356 = vmatprep.subr.mxu0 0.0
        %1357 = vmatpush1.msra.mxu0 %v230
        %1358 = vmatprep.subr.mxu0 0.0
        %1359 = vmatpush1.msra.mxu0 %v229
        %1360 = vmatprep.subr.mxu0 0.0
        %1361 = vmatpush2.msra.mxu0 0.0
        %1362 = vmatprep.subr.mxu0 0.0
        %1363 = vmatpush2.msra.mxu0 0.0
        %1364 = vmatprep.subr.mxu0 0.0
        %1365 = vmatpush2.msra.mxu0 0.0
        %1366 = vmatprep.subr.mxu0 0.0
        %1367 = vmatpush2.msra.mxu0 0.0
        %1368 = vmatprep.subr.mxu0 0.0
        %1369 = vmatpush2.msra.mxu0 0.0
        %1370 = vmatprep.subr.mxu0 0.0
        %1371 = vmatpush2.msra.mxu0 0.0
        %1372 = vmatprep.subr.mxu0 0.0
        %1373 = vmatpush2.msra.mxu0 0.0
        %1374 = vmatprep.subr.mxu0 0.0
        %1375 = vmatpush2.msra.mxu0 0.0
        %1376 = vmatprep.subr.mxu0 0.0
        %1377 = vmatpush2.msra.mxu0 0.0
        %1378 = vmatprep.subr.mxu0 0.0
        %1379 = vmatpush2.msra.mxu0 0.0
        %1380 = vmatprep.subr.mxu0 0.0
        %1381 = vmatpush2.msra.mxu0 0.0
        %1382 = vmatprep.subr.mxu0 0.0
        %1383 = vmatpush2.msra.mxu0 0.0
        %1384 = vmatprep.subr.mxu0 0.0
        %1385 = vmatpush2.msra.mxu0 0.0
        %1386 = vmatprep.subr.mxu0 0.0
        %1387 = vmatpush2.msra.mxu0 0.0
        %1388 = vmatprep.subr.mxu0 0.0
        %1389 = vmatpush2.msra.mxu0 0.0
        %1390 = vmatprep.subr.mxu0 0.0
        %1391 = vmatpush2.msra.mxu0 0.0
        %1392 = vmatprep.mubr.f32.mxu0 0.0
        %1393 = vmatmul.mubr.f32.gmra.mxu0 %v1327
        %v1394 = vpop.f32.mrf.mxu0
        %v1395 = vadd.f32 0.0, %v1394
        %v1396 = vpop.f32.mrf.mxu0
        %1397 = vdwg.mxu0
        %v1398 = vmax.f32 %v1326, %v1395
        %v1400 = vlaneseq
        %v1401 = vshrl.u32 %v1400, 7
        %v1402 = vsub.s32 0, %v1401
        %v1403 = vrot.slane %v245, %v1402
        %v1405 = vadd.f32 %v1398, %v1403
        %v1406 = vmax.f32 %v1405, 0.0
        %1407 = vst [vmem:[%s228] sm:$0xff] %v1406
        %s1408 = sand.u32 %s119, 1
        %s1409 = scalar_lea.sflag [#allocation5], %s1408
        %s1410 = sand.u32 %s119, 1
        %s1411 = smul.addr %s1410, 8
        %s1412 = scalar_lea.vmem [#allocation8], %s1411
        // Predicated region
        $region45: #{tpu_custom_call.1} parent=35 // pred_check
          %p1413 = pneg %p129
        $region46: #{tpu_custom_call.1} parent=35 // pred_check_branch
          %1415 = sbr.rel (%p1413) target = $region48
        $region47: #{tpu_custom_call.1} parent=35 // pred_region
          %s1417 = ssub.s32 128, 128
          %1418 = vsyncadd %s1409, %s1417
          %s1419 = smul.addr %s22, 128
          %s1420 = scalar_lea.hbm %s4, %s1419
          %s1422 = sshll.u32 %s1412, 4
          %s1423 = int_to_ptr.vmem [resolvable:$true] %s1422
          %1425 = dma.vmem_to_hbm [thread:$0]  %s1423, 128, %s1420, %s1409
        $region48: #{tpu_custom_call.1} parent=35 // pred_fallthru
          _
      $region36: #{tpu_custom_call.1} parent=5 // pred_fallthru
        _
      %p1426 = scmp.le.s32.totalorder 2, %s17
      // Predicated region
      $region49: #{tpu_custom_call.1} parent=5 // pred_check
        %p1427 = pneg %p1426
      $region50: #{tpu_custom_call.1} parent=5 // pred_check_branch
        %1429 = sbr.rel (%p1427) target = $region52
      $region51: #{tpu_custom_call.1} parent=5 // pred_region
        %s1430 = ssub.s32 %s17, 2
        // Predicated region
        $region53: #{tpu_custom_call.1} parent=51 // pred_check
          %p1431 = pneg %p135
        $region54: #{tpu_custom_call.1} parent=51 // pred_check_branch
          %1433 = sbr.rel (%p1431) target = $region56
        $region55: #{tpu_custom_call.1} parent=51 // pred_region
          %s1434 = sand.u32 %s120, 1
          %s1435 = scalar_lea.sflag [#allocation5], %s1434
          %s1436 = sand.u32 %s120, 1
          %s1437 = smul.addr %s1436, 8
          %s1438 = scalar_lea.vmem [#allocation8], %s1437
          %1439 = dma.done %s1435, 128
        $region56: #{tpu_custom_call.1} parent=51 // pred_fallthru
          _
      $region52: #{tpu_custom_call.1} parent=5 // pred_fallthru
        _
    $region6: #{tpu_custom_call.1} parent=1 // loop_footer
      %s21 = sadd.s32 1, %s17
    $region7: #{tpu_custom_call.1} parent=1 // loop_footer_branch
      %16 = sbr.rel target = $region3
    $region8: #{tpu_custom_call.1} parent=1 // loop_exit
      _
    %1440 = vsyncpa [#allocation4], 1
    %s1441 = scalar_lea.sflag [#allocation4], 1
    %1442 = vsyncpa %s1441, 1
    %1443 = vsyncpa [#allocation7], 1
    %1444 = vsyncpa [#allocation5], 1
    %s1445 = scalar_lea.sflag [#allocation5], 1
    %1446 = vsyncpa %s1445, 1

</llo_original>
